<compile_context>
chip_gen: v7x
topology: tpu7x:2x2x1
jax: 0.10.0
libtpu: 0.0.40
codegen_flags: <defaults>
</compile_context>

<pallas_src>
import functools
import math

import jax
import jax.numpy as jnp
from jax.experimental import pallas as pl
from jax.experimental.pallas import tpu as pltpu

_VMEM_LIMIT_BYTES = 48 * 1024 * 1024  # < 64 MiB physical on v7x, fine on v5e/v6e


# --------------------------------------------------------------------------
# Tiling helpers
# --------------------------------------------------------------------------
def _pick_tile(dim, target, align):
    """Largest tile <= target that divides `dim` and is `align`-aligned.
    Falls back to the full dim (always a legal Pallas block)."""
    if dim <= target:
        return dim
    t = (target // align) * align
    while t >= align:
        if dim % t == 0:
            return t
        t -= align
    return dim


def _pick_head_block(bh, target):
    """Divisor of `bh` <= target, trying to leave >=2 blocks so both v7x
    TensorCores get work on the parallel BH axis."""
    if bh <= 1:
        return 1
    target = min(target, max(1, bh // 2))
    h = min(target, bh)
    while bh % h:
        h -= 1
    return max(h, 1)


# --------------------------------------------------------------------------
# Tiled bias-free matmul (GPT-J projections have no bias)
# --------------------------------------------------------------------------
def _matmul_kernel(x_ref, w_ref, o_ref, acc_ref):
    @pl.when(pl.program_id(2) == 0)
    def _():
        acc_ref[...] = jnp.zeros_like(acc_ref)

    acc_ref[...] += jnp.dot(x_ref[...], w_ref[...],
                            preferred_element_type=jnp.float32)

    @pl.when(pl.program_id(2) == pl.num_programs(2) - 1)
    def _():
        o_ref[...] = acc_ref[...].astype(o_ref.dtype)


def linear_nobias(x, w, *, out_dtype=jnp.float32, tm=256, tn=512, tk=512):
    """y = x @ w, K-tiled with a VMEM f32 accumulator (double-buffered DMA)."""
    M, K = x.shape
    K2, N = w.shape
    assert K == K2
    btm = _pick_tile(M, tm, 8)      # sublane axis of x / out
    btn = _pick_tile(N, tn, 128)    # lane axis of w / out (lane-dense stores)
    btk = _pick_tile(K, tk, 128)    # lane of x, sublane of w
    grid = (M // btm, N // btn, K // btk)
    return pl.pallas_call(
        _matmul_kernel,
        out_shape=jax.ShapeDtypeStruct((M, N), out_dtype),
        grid_spec=pltpu.PrefetchScalarGridSpec(
            num_scalar_prefetch=0,
            grid=grid,
            in_specs=[
                pl.BlockSpec((btm, btk), lambda i, j, k: (i, k)),
                pl.BlockSpec((btk, btn), lambda i, j, k: (k, j)),
            ],
            out_specs=pl.BlockSpec((btm, btn), lambda i, j, k: (i, j)),
            scratch_shapes=[pltpu.VMEM((btm, btn), jnp.float32)],
        ),
        compiler_params=pltpu.CompilerParams(
            dimension_semantics=("parallel", "parallel", "arbitrary"),
            vmem_limit_bytes=_VMEM_LIMIT_BYTES),
    )(x, w)


# --------------------------------------------------------------------------
# Flash-style causal attention: grid = (head-blocks, q-tiles, kv-tiles)
# --------------------------------------------------------------------------
def _flash_causal_kernel(q_ref, k_ref, v_ref, o_ref, m_sc, l_sc, acc_sc,
                         *, scale, tq, tk):
    qi = pl.program_id(1)
    ki = pl.program_id(2)

    @pl.when(ki == 0)
    def _():
        m_sc[...] = jnp.full_like(m_sc, -jnp.inf)
        l_sc[...] = jnp.zeros_like(l_sc)
        acc_sc[...] = jnp.zeros_like(acc_sc)

    # Causality: kv tiles strictly above the diagonal contribute nothing -> skip.
    @pl.when(ki <= qi)
    def _():
        s = jnp.einsum("hqd,hkd->hqk", q_ref[...], k_ref[...],
                       preferred_element_type=jnp.float32) * scale
        # The iota mask only matters on the diagonal block; off-diagonal
        # contributing blocks (ki < qi) are fully visible.
        row = qi * tq + jax.lax.broadcasted_iota(jnp.int32, s.shape, 1)
        col = ki * tk + jax.lax.broadcasted_iota(jnp.int32, s.shape, 2)
        s = jnp.where((ki < qi) | (col <= row), s, -1e30)

        m_prev = m_sc[...]
        m_new = jnp.maximum(m_prev, jnp.max(s, axis=-1, keepdims=True))
        alpha = jnp.exp(m_prev - m_new)
        p = jnp.exp(s - m_new)
        l_sc[...] = alpha * l_sc[...] + jnp.sum(p, axis=-1, keepdims=True)
        acc_sc[...] = alpha * acc_sc[...] + jnp.einsum(
            "hqk,hkd->hqd", p.astype(v_ref.dtype), v_ref[...],
            preferred_element_type=jnp.float32)
        m_sc[...] = m_new

    @pl.when(ki == pl.num_programs(2) - 1)
    def _():
        inv_l = pl.reciprocal(l_sc[...], approx=True)   # EUP slot, ~free
        o_ref[...] = (acc_sc[...] * inv_l).astype(o_ref.dtype)


def flash_causal_attention(q, k, v, *, scale, out_dtype=None,
                           q_tile=128, head_block=8):
    """q, k, v: [B*H, S, D] -> [B*H, S, D] causal softmax attention."""
    BH, S, D = q.shape
    out_dtype = out_dtype or q.dtype
    tq = _pick_tile(S, q_tile, 8)
    tk = tq                              # block-level causal skip assumes tq == tk
    hb = _pick_head_block(BH, head_block)
    kernel = functools.partial(_flash_causal_kernel, scale=scale, tq=tq, tk=tk)
    return pl.pallas_call(
        kernel,
        out_shape=jax.ShapeDtypeStruct((BH, S, D), out_dtype),
        grid_spec=pltpu.PrefetchScalarGridSpec(
            num_scalar_prefetch=0,
            grid=(BH // hb, S // tq, S // tk),
            in_specs=[
                pl.BlockSpec((hb, tq, D), lambda b, qi, ki: (b, qi, 0)),
                pl.BlockSpec((hb, tk, D), lambda b, qi, ki: (b, ki, 0)),
                pl.BlockSpec((hb, tk, D), lambda b, qi, ki: (b, ki, 0)),
            ],
            out_specs=pl.BlockSpec((hb, tq, D), lambda b, qi, ki: (b, qi, 0)),
            scratch_shapes=[
                pltpu.VMEM((hb, tq, 1), jnp.float32),   # running max
                pltpu.VMEM((hb, tq, 1), jnp.float32),   # running denom
                pltpu.VMEM((hb, tq, D), jnp.float32),   # output accumulator
            ],
        ),
        compiler_params=pltpu.CompilerParams(
            dimension_semantics=("parallel", "parallel", "arbitrary"),
            vmem_limit_bytes=_VMEM_LIMIT_BYTES),
    )(q, k, v)


# --------------------------------------------------------------------------
# GPT-J partial interleaved rotary embedding (plain-JAX glue)
# --------------------------------------------------------------------------
def _rope_tables(seq, head_dim, rotary_dim, base=10000.0):
    """cos/sin tables repeat-interleaved to rotary_dim and padded to head_dim
    with cos=1 / sin=0 so the pass-through dims need no slicing/concat."""
    assert rotary_dim % 2 == 0 and 0 < rotary_dim <= head_dim
    inv_freq = 1.0 / (base ** (jnp.arange(0, rotary_dim, 2, dtype=jnp.float32)
                               / rotary_dim))
    pos = jnp.arange(seq, dtype=jnp.float32)
    freqs = jnp.einsum("s,f->sf", pos, inv_freq)            # [S, rot/2]
    cos = jnp.repeat(jnp.cos(freqs), 2, axis=-1)            # [S, rot]
    sin = jnp.repeat(jnp.sin(freqs), 2, axis=-1)
    pad = head_dim - rotary_dim
    if pad:
        cos = jnp.concatenate([cos, jnp.ones((seq, pad), jnp.float32)], axis=-1)
        sin = jnp.concatenate([sin, jnp.zeros((seq, pad), jnp.float32)], axis=-1)
    return cos, sin


def _gptj_rope(x, cos_full, sin_full):
    """x: [B, S, nh, D].  rotate_every_two(x)[j] = -x[j+1] (even j) / x[j-1] (odd j),
    expressed with rolls + parity select (no rot/pass slicing or concats)."""
    xm = jnp.roll(x, -1, axis=-1)     # x[j+1]
    xp = jnp.roll(x, 1, axis=-1)      # x[j-1]
    j = jnp.arange(x.shape[-1])
    rot = jnp.where(j % 2 == 0, -xm, xp)
    c = cos_full[None, :, None, :]
    s = sin_full[None, :, None, :]
    return x * c + rot * s


# --------------------------------------------------------------------------
# Full forward
# --------------------------------------------------------------------------
def gptj_attention_forward(hidden_states, params, *, num_heads, rotary_dim,
                           rope_base=10000.0, compute_dtype=None):
    """params:
         w_qkv : [hidden, 3*hidden]  == concat([Wq^T, Wk^T, Wv^T], axis=1) (no bias)
         w_out : [hidden, hidden]    == Wout^T (no bias)
       compute_dtype: e.g. jnp.bfloat16 to feed the MXU in bf16 (f32 accumulate)."""
    B, S, H = hidden_states.shape
    D = H // num_heads
    scale = 1.0 / math.sqrt(D)
    out_dtype = hidden_states.dtype

    def mm_cast(a):
        return a if compute_dtype is None else a.astype(compute_dtype)

    # ---- fused QKV projection (tiled Pallas matmul) ----
    x = hidden_states.reshape(B * S, H)
    qkv = linear_nobias(mm_cast(x), mm_cast(params["w_qkv"]), out_dtype=jnp.float32)
    qkv = qkv.reshape(B, S, 3, num_heads, D)
    q, k, v = qkv[:, :, 0], qkv[:, :, 1], qkv[:, :, 2]        # [B, S, nh, D]

    # ---- GPT-J partial interleaved rotary on q, k ----
    # TODO(synk): RoPE + the head transpose remain plain-JAX glue between the two
    # pallas_calls; fusing them into the attention kernel (pltpu.roll on the XLU)
    # would remove ~2 extra HBM round trips over q/k.
    cos_f, sin_f = _rope_tables(S, D, rotary_dim, rope_base)
    q = _gptj_rope(q, cos_f, sin_f)
    k = _gptj_rope(k, cos_f, sin_f)

    # [B, S, nh, D] -> [B*nh, S, D]
    q = jnp.transpose(q, (0, 2, 1, 3)).reshape(B * num_heads, S, D)
    k = jnp.transpose(k, (0, 2, 1, 3)).reshape(B * num_heads, S, D)
    v = jnp.transpose(v, (0, 2, 1, 3)).reshape(B * num_heads, S, D)

    # downcast_qk=True: cast q, k to the value dtype (no-op in f32)
    q = q.astype(v.dtype)
    k = k.astype(v.dtype)

    # ---- causal flash attention (Pallas), scale = 1/sqrt(head_dim) ----
    attn = flash_causal_attention(mm_cast(q), mm_cast(k), mm_cast(v),
                                  scale=scale, out_dtype=out_dtype)
    attn = attn.reshape(B, num_heads, S, D)
    attn = jnp.transpose(attn, (0, 2, 1, 3)).reshape(B * S, H)   # merge_heads

    # ---- output projection (tiled Pallas matmul, no bias, no resid dropout) ----
    out = linear_nobias(mm_cast(attn), mm_cast(params["w_out"]), out_dtype=out_dtype)
    return out.reshape(B, S, H)


# --------------------------------------------------------------------------
# Pure-JAX reference (direct port of the HF GPT-J / BetterTransformer math)
# --------------------------------------------------------------------------
def gptj_attention_reference(hidden_states, params, *, num_heads, rotary_dim,
                             rope_base=10000.0):
    B, S, H = hidden_states.shape
    D = H // num_heads
    qkv = hidden_states.reshape(B * S, H) @ params["w_qkv"]
    qkv = qkv.reshape(B, S, 3, num_heads, D)
    q, k, v = qkv[:, :, 0], qkv[:, :, 1], qkv[:, :, 2]

    inv_freq = 1.0 / (rope_base ** (jnp.arange(0, rotary_dim, 2, dtype=jnp.float32)
                                    / rotary_dim))
    freqs = jnp.einsum("s,f->sf", jnp.arange(S, dtype=jnp.float32), inv_freq)
    cos = jnp.repeat(jnp.cos(freqs), 2, axis=-1)[None, :, None, :]
    sin = jnp.repeat(jnp.sin(freqs), 2, axis=-1)[None, :, None, :]

    def rotate_every_two(t):
        t1, t2 = t[..., ::2], t[..., 1::2]
        return jnp.stack([-t2, t1], axis=-1).reshape(t.shape)

    q_rot, q_pass = q[..., :rotary_dim], q[..., rotary_dim:]
    k_rot, k_pass = k[..., :rotary_dim], k[..., rotary_dim:]
    q = jnp.concatenate([q_rot * cos + rotate_every_two(q_rot) * sin, q_pass], -1)
    k = jnp.concatenate([k_rot * cos + rotate_every_two(k_rot) * sin, k_pass], -1)

    q = jnp.transpose(q, (0, 2, 1, 3))
    k = jnp.transpose(k, (0, 2, 1, 3))
    v = jnp.transpose(v, (0, 2, 1, 3))

    s = jnp.einsum("bhqd,bhkd->bhqk", q, k) / math.sqrt(D)
    s = jnp.where(jnp.tril(jnp.ones((S, S), bool)), s, -jnp.inf)
    p = jax.nn.softmax(s, axis=-1)
    o = jnp.einsum("bhqk,bhkd->bhqd", p, v)
    o = jnp.transpose(o, (0, 2, 1, 3)).reshape(B * S, H)
    return (o @ params["w_out"]).reshape(B, S, H)


# --------------------------------------------------------------------------
if __name__ == "__main__":
    batch, seq, hidden, num_heads = 2, 8, 32, 4
    head_dim = hidden // num_heads          # 8
    rotary_dim = 4                          # partial rotary, GPT-J style

    key = jax.random.PRNGKey(0)
    kx, kq, kk, kv, ko = jax.random.split(key, 5)
    wscale = 1.0 / math.sqrt(hidden)
    hidden_states = jax.random.normal(kx, (batch, seq, hidden), jnp.float32)
    params = {
        # [in, out] layout; w_qkv == concat([Wq^T, Wk^T, Wv^T], axis=1)
        "w_qkv": jnp.concatenate(
            [jax.random.normal(kq, (hidden, hidden), jnp.float32) * wscale,
             jax.random.normal(kk, (hidden, hidden), jnp.float32) * wscale,
             jax.random.normal(kv, (hidden, hidden), jnp.float32) * wscale], axis=1),
        "w_out": jax.random.normal(ko, (hidden, hidden), jnp.float32) * wscale,
    }

    fwd = jax.jit(functools.partial(gptj_attention_forward,
                                    num_heads=num_heads, rotary_dim=rotary_dim))
    out = jax.block_until_ready(fwd(hidden_states, params))

    ref = gptj_attention_reference(hidden_states, params,
                                   num_heads=num_heads, rotary_dim=rotary_dim)

    assert out.shape == (batch, seq, hidden)
    assert bool(jnp.all(jnp.isfinite(out)))
    assert bool(jnp.allclose(out, ref, rtol=2e-2, atol=2e-2))
    # TODO(synk): layer_past / use_cache KV-cache, padded attention_mask, head_mask
    # and dropout paths of the HF forward are not implemented (BetterTransformer
    # inference SDPA path with causal mask only).
    print("KERNEL_OK")
</pallas_src>

<mosaic_0001>
module attributes {stable_mosaic.version = 11 : i64} {
  func.func @_matmul_kernel(%arg0: i32, %arg1: i32, %arg2: i32, %arg3: memref<16x32xf32, #tpu.memory_space<vmem>>, %arg4: memref<32x96xf32, #tpu.memory_space<vmem>>, %arg5: memref<16x96xf32, #tpu.memory_space<vmem>>, %arg6: memref<16x96xf32, #tpu.memory_space<vmem>>) attributes {dimension_semantics = [#tpu.dimension_semantics<parallel>, #tpu.dimension_semantics<parallel>, #tpu.dimension_semantics<arbitrary>], iteration_bounds = array<i64: 1, 1, 1>, scalar_prefetch = 0 : i64, scratch_operands = 1 : i64, tpu.core_type = #tpu.core_type<tc>, window_params = [{transform_indices = @transform_0, window_bounds = array<i64: 16, 32>}, {transform_indices = @transform_1, window_bounds = array<i64: 32, 96>}, {transform_indices = @transform_2, window_bounds = array<i64: 16, 96>}]} {
    %c0_i32 = arith.constant 0 : i32
    %0 = arith.cmpi eq, %arg2, %c0_i32 : i32
    %1 = arith.extui %0 : i1 to i32
    %c0_i32_0 = arith.constant 0 : i32
    %2 = arith.cmpi ne, %1, %c0_i32_0 : i32
    scf.if %2 {
      %cst_10 = arith.constant 0.000000e+00 : f32
      %12 = vector.broadcast %cst_10 : f32 to vector<16x96xf32>
      %c0_11 = arith.constant 0 : index
      %c0_12 = arith.constant 0 : index
      %13 = vector.load %arg6[%c0_11, %c0_12] : memref<16x96xf32, #tpu.memory_space<vmem>>, vector<16x96xf32>
      tpu.vector_store %arg6[%c0_11, %c0_12], %12 {strides = array<i32>} : memref<16x96xf32, #tpu.memory_space<vmem>>, vector<16x96xf32>,
    } else {
    }
    %c0 = arith.constant 0 : index
    %c0_1 = arith.constant 0 : index
    %3 = vector.load %arg6[%c0, %c0_1] : memref<16x96xf32, #tpu.memory_space<vmem>>, vector<16x96xf32>
    %c0_2 = arith.constant 0 : index
    %c0_3 = arith.constant 0 : index
    %4 = vector.load %arg3[%c0_2, %c0_3] : memref<16x32xf32, #tpu.memory_space<vmem>>, vector<16x32xf32>
    %c0_4 = arith.constant 0 : index
    %c0_5 = arith.constant 0 : index
    %5 = vector.load %arg4[%c0_4, %c0_5] : memref<32x96xf32, #tpu.memory_space<vmem>>, vector<32x96xf32>
    %cst = arith.constant dense<0.000000e+00> : vector<16x96xf32>
    %6 = tpu.matmul %4, %5, %cst {dimension_numbers = #tpu.dot_dimension_numbers<[1], [0], [0], [1], [0, 0, 1, 1], [], []>} : vector<16x32xf32>, vector<32x96xf32>, vector<16x96xf32> -> vector<16x96xf32>
    %7 = arith.addf %3, %6 : vector<16x96xf32>
    %c0_6 = arith.constant 0 : index
    %c0_7 = arith.constant 0 : index
    %8 = vector.load %arg6[%c0_6, %c0_7] : memref<16x96xf32, #tpu.memory_space<vmem>>, vector<16x96xf32>
    tpu.vector_store %arg6[%c0_6, %c0_7], %7 {strides = array<i32>} : memref<16x96xf32, #tpu.memory_space<vmem>>, vector<16x96xf32>,
    %c0_i32_8 = arith.constant 0 : i32
    %9 = arith.cmpi eq, %arg2, %c0_i32_8 : i32
    %10 = arith.extui %9 : i1 to i32
    %c0_i32_9 = arith.constant 0 : i32
    %11 = arith.cmpi ne, %10, %c0_i32_9 : i32
    scf.if %11 {
      %c0_10 = arith.constant 0 : index
      %c0_11 = arith.constant 0 : index
      %12 = vector.load %arg6[%c0_10, %c0_11] : memref<16x96xf32, #tpu.memory_space<vmem>>, vector<16x96xf32>
      %c0_12 = arith.constant 0 : index
      %c0_13 = arith.constant 0 : index
      %13 = vector.load %arg5[%c0_12, %c0_13] : memref<16x96xf32, #tpu.memory_space<vmem>>, vector<16x96xf32>
      tpu.vector_store %arg5[%c0_12, %c0_13], %12 {strides = array<i32>} : memref<16x96xf32, #tpu.memory_space<vmem>>, vector<16x96xf32>,
    } else {
    }
    return
  }
  func.func @transform_0(%arg0: i32, %arg1: i32, %arg2: i32) -> (i32, i32) {
    %c0_i32 = arith.constant 0 : i32
    return %arg0, %arg2 : i32, i32
  }
  func.func @transform_1(%arg0: i32, %arg1: i32, %arg2: i32) -> (i32, i32) {
    %c0_i32 = arith.constant 0 : i32
    return %arg2, %arg1 : i32, i32
  }
  func.func @transform_2(%arg0: i32, %arg1: i32, %arg2: i32) -> (i32, i32) {
    %c0_i32 = arith.constant 0 : i32
    return %arg0, %arg1 : i32, i32
  }
}

module attributes {stable_mosaic.version = 11 : i64} {
  func.func @_flash_causal_kernel(%arg0: i32, %arg1: i32, %arg2: i32, %arg3: memref<4x8x8xf32, #tpu.memory_space<vmem>>, %arg4: memref<4x8x8xf32, #tpu.memory_space<vmem>>, %arg5: memref<4x8x8xf32, #tpu.memory_space<vmem>>, %arg6: memref<4x8x8xf32, #tpu.memory_space<vmem>>, %arg7: memref<4x8x1xf32, #tpu.memory_space<vmem>>, %arg8: memref<4x8x1xf32, #tpu.memory_space<vmem>>, %arg9: memref<4x8x8xf32, #tpu.memory_space<vmem>>) attributes {dimension_semantics = [#tpu.dimension_semantics<parallel>, #tpu.dimension_semantics<parallel>, #tpu.dimension_semantics<arbitrary>], iteration_bounds = array<i64: 2, 1, 1>, scalar_prefetch = 0 : i64, scratch_operands = 3 : i64, tpu.core_type = #tpu.core_type<tc>, window_params = [{transform_indices = @transform_0, window_bounds = array<i64: 4, 8, 8>}, {transform_indices = @transform_1, window_bounds = array<i64: 4, 8, 8>}, {transform_indices = @transform_2, window_bounds = array<i64: 4, 8, 8>}, {transform_indices = @transform_3, window_bounds = array<i64: 4, 8, 8>}]} {
    %c0_i32 = arith.constant 0 : i32
    %0 = arith.cmpi eq, %arg2, %c0_i32 : i32
    %1 = arith.extui %0 : i1 to i32
    %c0_i32_0 = arith.constant 0 : i32
    %2 = arith.cmpi ne, %1, %c0_i32_0 : i32
    scf.if %2 {
      %cst = arith.constant 0xFF800000 : f32
      %9 = vector.broadcast %cst : f32 to vector<4x8x1xf32>
      %c0 = arith.constant 0 : index
      %c0_4 = arith.constant 0 : index
      %c0_5 = arith.constant 0 : index
      %10 = vector.load %arg7[%c0, %c0_4, %c0_5] : memref<4x8x1xf32, #tpu.memory_space<vmem>>, vector<4x8x1xf32>
      tpu.vector_store %arg7[%c0, %c0_4, %c0_5], %9 {strides = array<i32>} : memref<4x8x1xf32, #tpu.memory_space<vmem>>, vector<4x8x1xf32>,
      %cst_6 = arith.constant 0.000000e+00 : f32
      %11 = vector.broadcast %cst_6 : f32 to vector<4x8x1xf32>
      %c0_7 = arith.constant 0 : index
      %c0_8 = arith.constant 0 : index
      %c0_9 = arith.constant 0 : index
      %12 = vector.load %arg8[%c0_7, %c0_8, %c0_9] : memref<4x8x1xf32, #tpu.memory_space<vmem>>, vector<4x8x1xf32>
      tpu.vector_store %arg8[%c0_7, %c0_8, %c0_9], %11 {strides = array<i32>} : memref<4x8x1xf32, #tpu.memory_space<vmem>>, vector<4x8x1xf32>,
      %cst_10 = arith.constant 0.000000e+00 : f32
      %13 = vector.broadcast %cst_10 : f32 to vector<4x8x8xf32>
      %c0_11 = arith.constant 0 : index
      %c0_12 = arith.constant 0 : index
      %c0_13 = arith.constant 0 : index
      %14 = vector.load %arg9[%c0_11, %c0_12, %c0_13] : memref<4x8x8xf32, #tpu.memory_space<vmem>>, vector<4x8x8xf32>
      tpu.vector_store %arg9[%c0_11, %c0_12, %c0_13], %13 {strides = array<i32>} : memref<4x8x8xf32, #tpu.memory_space<vmem>>, vector<4x8x8xf32>,
    } else {
    }
    %3 = arith.cmpi sle, %arg2, %arg1 : i32
    %4 = arith.extui %3 : i1 to i32
    %c0_i32_1 = arith.constant 0 : i32
    %5 = arith.cmpi ne, %4, %c0_i32_1 : i32
    scf.if %5 {
      %c0 = arith.constant 0 : index
      %c0_4 = arith.constant 0 : index
      %c0_5 = arith.constant 0 : index
      %9 = vector.load %arg3[%c0, %c0_4, %c0_5] : memref<4x8x8xf32, #tpu.memory_space<vmem>>, vector<4x8x8xf32>
      %c0_6 = arith.constant 0 : index
      %c0_7 = arith.constant 0 : index
      %c0_8 = arith.constant 0 : index
      %10 = vector.load %arg4[%c0_6, %c0_7, %c0_8] : memref<4x8x8xf32, #tpu.memory_space<vmem>>, vector<4x8x8xf32>
      "tpu.trace_start"() <{level = 10 : i32, message = "hqd,hkd->hqk"}> : () -> ()
      %cst = arith.constant dense<0.000000e+00> : vector<4x8x8xf32>
      %11 = tpu.matmul %9, %10, %cst {dimension_numbers = #tpu.dot_dimension_numbers<[2], [2], [1], [1], [0, 0, 0, 1, 1, 1], [0], [0]>} : vector<4x8x8xf32>, vector<4x8x8xf32>, vector<4x8x8xf32> -> vector<4x8x8xf32>
      "tpu.trace_stop"() : () -> ()
      %cst_9 = arith.constant 0.353553385 : f32
      %12 = vector.broadcast %cst_9 : f32 to vector<4x8x8xf32>
      %13 = arith.mulf %11, %12 : vector<4x8x8xf32>
      %c8_i32 = arith.constant 8 : i32
      %14 = arith.muli %arg1, %c8_i32 : i32
      %15 = tpu.iota {dimensions = array<i32: 1>} : vector<4x8x8xi32>
      %16 = vector.broadcast %14 : i32 to vector<4x8x8xi32>
      %17 = arith.addi %16, %15 : vector<4x8x8xi32>
      %c8_i32_10 = arith.constant 8 : i32
      %18 = arith.muli %arg2, %c8_i32_10 : i32
      %19 = tpu.iota {dimensions = array<i32: 2>} : vector<4x8x8xi32>
      %20 = vector.broadcast %18 : i32 to vector<4x8x8xi32>
      %21 = arith.addi %20, %19 : vector<4x8x8xi32>
      %22 = arith.cmpi slt, %arg2, %arg1 : i32
      %23 = arith.cmpi sle, %21, %17 : vector<4x8x8xi32>
      %24 = vector.broadcast %22 : i1 to vector<4x8x8xi1>
      %25 = arith.ori %24, %23 : vector<4x8x8xi1>
      %cst_11 = arith.constant -1.000000e+30 : f32
      %26 = vector.broadcast %cst_11 : f32 to vector<4x8x8xf32>
      %27 = arith.select %25, %13, %26 : vector<4x8x8xi1>, vector<4x8x8xf32>
      %c0_12 = arith.constant 0 : index
      %c0_13 = arith.constant 0 : index
      %c0_14 = arith.constant 0 : index
      %28 = vector.load %arg7[%c0_12, %c0_13, %c0_14] : memref<4x8x1xf32, #tpu.memory_space<vmem>>, vector<4x8x1xf32>
      %cst_15 = arith.constant dense<0xFF800000> : vector<4x8xf32>
      %29 = vector.multi_reduction <maximumf>, %27, %cst_15 [2] : vector<4x8x8xf32> to vector<4x8xf32>
      %30 = vector.shape_cast %29 : vector<4x8xf32> to vector<4x8x1xf32>
      %31 = arith.maximumf %28, %30 : vector<4x8x1xf32>
      %32 = arith.subf %28, %31 : vector<4x8x1xf32>
      %33 = math.exp %32 : vector<4x8x1xf32>
      %34 = vector.broadcast %31 : vector<4x8x1xf32> to vector<4x8x8xf32>
      %35 = arith.subf %27, %34 : vector<4x8x8xf32>
      %36 = math.exp %35 : vector<4x8x8xf32>
      %c0_16 = arith.constant 0 : index
      %c0_17 = arith.constant 0 : index
      %c0_18 = arith.constant 0 : index
      %37 = vector.load %arg8[%c0_16, %c0_17, %c0_18] : memref<4x8x1xf32, #tpu.memory_space<vmem>>, vector<4x8x1xf32>
      %38 = arith.mulf %33, %37 : vector<4x8x1xf32>
      %cst_19 = arith.constant dense<0.000000e+00> : vector<4x8xf32>
      %39 = vector.multi_reduction <add>, %36, %cst_19 [2] : vector<4x8x8xf32> to vector<4x8xf32>
      %40 = vector.shape_cast %39 : vector<4x8xf32> to vector<4x8x1xf32>
      %41 = arith.addf %38, %40 : vector<4x8x1xf32>
      %c0_20 = arith.constant 0 : index
      %c0_21 = arith.constant 0 : index
      %c0_22 = arith.constant 0 : index
      %42 = vector.load %arg8[%c0_20, %c0_21, %c0_22] : memref<4x8x1xf32, #tpu.memory_space<vmem>>, vector<4x8x1xf32>
      tpu.vector_store %arg8[%c0_20, %c0_21, %c0_22], %41 {strides = array<i32>} : memref<4x8x1xf32, #tpu.memory_space<vmem>>, vector<4x8x1xf32>,
      %c0_23 = arith.constant 0 : index
      %c0_24 = arith.constant 0 : index
      %c0_25 = arith.constant 0 : index
      %43 = vector.load %arg9[%c0_23, %c0_24, %c0_25] : memref<4x8x8xf32, #tpu.memory_space<vmem>>, vector<4x8x8xf32>
      %44 = vector.broadcast %33 : vector<4x8x1xf32> to vector<4x8x8xf32>
      %45 = arith.mulf %44, %43 : vector<4x8x8xf32>
      %c0_26 = arith.constant 0 : index
      %c0_27 = arith.constant 0 : index
      %c0_28 = arith.constant 0 : index
      %46 = vector.load %arg5[%c0_26, %c0_27, %c0_28] : memref<4x8x8xf32, #tpu.memory_space<vmem>>, vector<4x8x8xf32>
      "tpu.trace_start"() <{level = 10 : i32, message = "hqk,hkd->hqd"}> : () -> ()
      %cst_29 = arith.constant dense<0.000000e+00> : vector<4x8x8xf32>
      %47 = tpu.matmul %36, %46, %cst_29 {dimension_numbers = #tpu.dot_dimension_numbers<[2], [1], [1], [2], [0, 0, 0, 1, 1, 2], [0], [0]>} : vector<4x8x8xf32>, vector<4x8x8xf32>, vector<4x8x8xf32> -> vector<4x8x8xf32>
      "tpu.trace_stop"() : () -> ()
      %48 = arith.addf %45, %47 : vector<4x8x8xf32>
      %c0_30 = arith.constant 0 : index
      %c0_31 = arith.constant 0 : index
      %c0_32 = arith.constant 0 : index
      %49 = vector.load %arg9[%c0_30, %c0_31, %c0_32] : memref<4x8x8xf32, #tpu.memory_space<vmem>>, vector<4x8x8xf32>
      tpu.vector_store %arg9[%c0_30, %c0_31, %c0_32], %48 {strides = array<i32>} : memref<4x8x8xf32, #tpu.memory_space<vmem>>, vector<4x8x8xf32>,
      %c0_33 = arith.constant 0 : index
      %c0_34 = arith.constant 0 : index
      %c0_35 = arith.constant 0 : index
      %50 = vector.load %arg7[%c0_33, %c0_34, %c0_35] : memref<4x8x1xf32, #tpu.memory_space<vmem>>, vector<4x8x1xf32>
      tpu.vector_store %arg7[%c0_33, %c0_34, %c0_35], %31 {strides = array<i32>} : memref<4x8x1xf32, #tpu.memory_space<vmem>>, vector<4x8x1xf32>,
    } else {
    }
    %c0_i32_2 = arith.constant 0 : i32
    %6 = arith.cmpi eq, %arg2, %c0_i32_2 : i32
    %7 = arith.extui %6 : i1 to i32
    %c0_i32_3 = arith.constant 0 : i32
    %8 = arith.cmpi ne, %7, %c0_i32_3 : i32
    scf.if %8 {
      %c0 = arith.constant 0 : index
      %c0_4 = arith.constant 0 : index
      %c0_5 = arith.constant 0 : index
      %9 = vector.load %arg8[%c0, %c0_4, %c0_5] : memref<4x8x1xf32, #tpu.memory_space<vmem>>, vector<4x8x1xf32>
      %10 = tpu.reciprocal %9 {approx = true} : vector<4x8x1xf32> -> vector<4x8x1xf32>
      %c0_6 = arith.constant 0 : index
      %c0_7 = arith.constant 0 : index
      %c0_8 = arith.constant 0 : index
      %11 = vector.load %arg9[%c0_6, %c0_7, %c0_8] : memref<4x8x8xf32, #tpu.memory_space<vmem>>, vector<4x8x8xf32>
      %12 = vector.broadcast %10 : vector<4x8x1xf32> to vector<4x8x8xf32>
      %13 = arith.mulf %11, %12 : vector<4x8x8xf32>
      %c0_9 = arith.constant 0 : index
      %c0_10 = arith.constant 0 : index
      %c0_11 = arith.constant 0 : index
      %14 = vector.load %arg6[%c0_9, %c0_10, %c0_11] : memref<4x8x8xf32, #tpu.memory_space<vmem>>, vector<4x8x8xf32>
      tpu.vector_store %arg6[%c0_9, %c0_10, %c0_11], %13 {strides = array<i32>} : memref<4x8x8xf32, #tpu.memory_space<vmem>>, vector<4x8x8xf32>,
    } else {
    }
    return
  }
  func.func @transform_0(%arg0: i32, %arg1: i32, %arg2: i32) -> (i32, i32, i32) {
    %c0_i32 = arith.constant 0 : i32
    %c0_i32_0 = arith.constant 0 : i32
    return %arg0, %arg1, %c0_i32 : i32, i32, i32
  }
  func.func @transform_1(%arg0: i32, %arg1: i32, %arg2: i32) -> (i32, i32, i32) {
    %c0_i32 = arith.constant 0 : i32
    %c0_i32_0 = arith.constant 0 : i32
    return %arg0, %arg2, %c0_i32 : i32, i32, i32
  }
  func.func @transform_2(%arg0: i32, %arg1: i32, %arg2: i32) -> (i32, i32, i32) {
    %c0_i32 = arith.constant 0 : i32
    %c0_i32_0 = arith.constant 0 : i32
    return %arg0, %arg2, %c0_i32 : i32, i32, i32
  }
  func.func @transform_3(%arg0: i32, %arg1: i32, %arg2: i32) -> (i32, i32, i32) {
    %c0_i32 = arith.constant 0 : i32
    %c0_i32_0 = arith.constant 0 : i32
    return %arg0, %arg1, %c0_i32 : i32, i32, i32
  }
}

module attributes {stable_mosaic.version = 11 : i64} {
  func.func @_matmul_kernel(%arg0: i32, %arg1: i32, %arg2: i32, %arg3: memref<16x32xf32, #tpu.memory_space<vmem>>, %arg4: memref<32x32xf32, #tpu.memory_space<vmem>>, %arg5: memref<16x32xf32, #tpu.memory_space<vmem>>, %arg6: memref<16x32xf32, #tpu.memory_space<vmem>>) attributes {dimension_semantics = [#tpu.dimension_semantics<parallel>, #tpu.dimension_semantics<parallel>, #tpu.dimension_semantics<arbitrary>], iteration_bounds = array<i64: 1, 1, 1>, scalar_prefetch = 0 : i64, scratch_operands = 1 : i64, tpu.core_type = #tpu.core_type<tc>, window_params = [{transform_indices = @transform_0, window_bounds = array<i64: 16, 32>}, {transform_indices = @transform_1, window_bounds = array<i64: 32, 32>}, {transform_indices = @transform_2, window_bounds = array<i64: 16, 32>}]} {
    %c0_i32 = arith.constant 0 : i32
    %0 = arith.cmpi eq, %arg2, %c0_i32 : i32
    %1 = arith.extui %0 : i1 to i32
    %c0_i32_0 = arith.constant 0 : i32
    %2 = arith.cmpi ne, %1, %c0_i32_0 : i32
    scf.if %2 {
      %cst_10 = arith.constant 0.000000e+00 : f32
      %12 = vector.broadcast %cst_10 : f32 to vector<16x32xf32>
      %c0_11 = arith.constant 0 : index
      %c0_12 = arith.constant 0 : index
      %13 = vector.load %arg6[%c0_11, %c0_12] : memref<16x32xf32, #tpu.memory_space<vmem>>, vector<16x32xf32>
      tpu.vector_store %arg6[%c0_11, %c0_12], %12 {strides = array<i32>} : memref<16x32xf32, #tpu.memory_space<vmem>>, vector<16x32xf32>,
    } else {
    }
    %c0 = arith.constant 0 : index
    %c0_1 = arith.constant 0 : index
    %3 = vector.load %arg6[%c0, %c0_1] : memref<16x32xf32, #tpu.memory_space<vmem>>, vector<16x32xf32>
    %c0_2 = arith.constant 0 : index
    %c0_3 = arith.constant 0 : index
    %4 = vector.load %arg3[%c0_2, %c0_3] : memref<16x32xf32, #tpu.memory_space<vmem>>, vector<16x32xf32>
    %c0_4 = arith.constant 0 : index
    %c0_5 = arith.constant 0 : index
    %5 = vector.load %arg4[%c0_4, %c0_5] : memref<32x32xf32, #tpu.memory_space<vmem>>, vector<32x32xf32>
    %cst = arith.constant dense<0.000000e+00> : vector<16x32xf32>
    %6 = tpu.matmul %4, %5, %cst {dimension_numbers = #tpu.dot_dimension_numbers<[1], [0], [0], [1], [0, 0, 1, 1], [], []>} : vector<16x32xf32>, vector<32x32xf32>, vector<16x32xf32> -> vector<16x32xf32>
    %7 = arith.addf %3, %6 : vector<16x32xf32>
    %c0_6 = arith.constant 0 : index
    %c0_7 = arith.constant 0 : index
    %8 = vector.load %arg6[%c0_6, %c0_7] : memref<16x32xf32, #tpu.memory_space<vmem>>, vector<16x32xf32>
    tpu.vector_store %arg6[%c0_6, %c0_7], %7 {strides = array<i32>} : memref<16x32xf32, #tpu.memory_space<vmem>>, vector<16x32xf32>,
    %c0_i32_8 = arith.constant 0 : i32
    %9 = arith.cmpi eq, %arg2, %c0_i32_8 : i32
    %10 = arith.extui %9 : i1 to i32
    %c0_i32_9 = arith.constant 0 : i32
    %11 = arith.cmpi ne, %10, %c0_i32_9 : i32
    scf.if %11 {
      %c0_10 = arith.constant 0 : index
      %c0_11 = arith.constant 0 : index
      %12 = vector.load %arg6[%c0_10, %c0_11] : memref<16x32xf32, #tpu.memory_space<vmem>>, vector<16x32xf32>
      %c0_12 = arith.constant 0 : index
      %c0_13 = arith.constant 0 : index
      %13 = vector.load %arg5[%c0_12, %c0_13] : memref<16x32xf32, #tpu.memory_space<vmem>>, vector<16x32xf32>
      tpu.vector_store %arg5[%c0_12, %c0_13], %12 {strides = array<i32>} : memref<16x32xf32, #tpu.memory_space<vmem>>, vector<16x32xf32>,
    } else {
    }
    return
  }
  func.func @transform_0(%arg0: i32, %arg1: i32, %arg2: i32) -> (i32, i32) {
    %c0_i32 = arith.constant 0 : i32
    return %arg0, %arg2 : i32, i32
  }
  func.func @transform_1(%arg0: i32, %arg1: i32, %arg2: i32) -> (i32, i32) {
    %c0_i32 = arith.constant 0 : i32
    return %arg2, %arg1 : i32, i32
  }
  func.func @transform_2(%arg0: i32, %arg1: i32, %arg2: i32) -> (i32, i32) {
    %c0_i32 = arith.constant 0 : i32
    return %arg0, %arg1 : i32, i32
  }
}

</mosaic_0001>

<llo_original>
// kernel: gptj_attention_forward.3
$region0: #{gptj_attention_forward.3}
  #allocation0 [shape = 'u32[]', space=smem, size = 0x4, offset = 0x4, fixed_abs, tag = 'smem constant byte address 0x4 - core index']
  #allocation1 [shape = 'u32[144,128]{1,0:T(1,128)}', space=vmem, size = 0x12000, scoped, tag = 'internal scratch']
  #allocation2 [shape = 'f32[16,96]{1,0:T(8,128)}', space=vmem, size = 0x2000, scoped, tag = 'scratch operand']
  %s0 = inlined_call_operand.vmem [shape: f32[16,32], index: 0, kind: input, shape index: {}]
  %s1 = inlined_call_operand.vmem [shape: f32[32,96], index: 1, kind: input, shape index: {}]
  %s2 = inlined_call_operand.vmem [shape: f32[16,96], index: 2, kind: output, shape index: {}]
  %s3 = sld [smem:[#allocation0]]
  $region26: #{gptj_attention_forward.3} parent=0
    _
  %s5 = ssub.s32 1, %s3
  %s6 = scalar_select 0, %s5, %s3
  // Predicated region
  $region2: #{gptj_attention_forward.3} parent=0 // pred_check
    _
  $region3: #{gptj_attention_forward.3} parent=0 // pred_check_branch
    %8 = sbr.rel (0) target = $region5
  $region4: #{gptj_attention_forward.3} parent=0 // pred_region
    _
  $region5: #{gptj_attention_forward.3} parent=0 // pred_fallthru
    _
  // Predicated region
  $region6: #{gptj_attention_forward.3} parent=0 // pred_check
    _
  $region7: #{gptj_attention_forward.3} parent=0 // pred_check_branch
    %10 = sbr.rel (0) target = $region9
  $region8: #{gptj_attention_forward.3} parent=0 // pred_region
    _
  $region9: #{gptj_attention_forward.3} parent=0 // pred_fallthru
    _
  %p11 = scmp.eq.s32.totalorder 0, 0
  // Predicated region
  $region10: #{gptj_attention_forward.3} parent=0 // pred_check
    %p12 = pneg %p11
  $region11: #{gptj_attention_forward.3} parent=0 // pred_check_branch
    %14 = sbr.rel (%p12) target = $region13
  $region12: #{gptj_attention_forward.3} parent=0 // pred_region
    %vm15 = vcmask 785408
    %16 = vst.msk [vmem:[#allocation2] sm:$0xff] %vm15, 0.0
    %17 = vst.msk [vmem:[#allocation2 + $0x8] sm:$0xff] %vm15, 0.0
  $region13: #{gptj_attention_forward.3} parent=0 // pred_fallthru
    _
  %v18 = vld [vmem:[#allocation2] sm:$0xff]
  %v19 = vld [vmem:[#allocation2 + $0x8] sm:$0xff]
  %v20 = vld [vmem:[%s0] sm:$0xff]
  %v21 = vld [vmem:[%s0 + $0x8] sm:$0xff]
  %v22 = vld [vmem:[%s1] sm:$0xff]
  %v23 = vld [vmem:[%s1 + $0x8] sm:$0xff]
  %v24 = vld [vmem:[%s1 + $0x10] sm:$0xff]
  %v25 = vld [vmem:[%s1 + $0x18] sm:$0xff]
  %vm26 = vcmask 261120
  %v28 = vsel %vm26, %v20, 0
  %v31 = vsel %vm26, %v21, 0
  %33 = vmatprep.subr.mxu0 0.0
  %34 = vmatpush1.msra.mxu0 %v22
  %35 = vmatprep.subr.mxu0 0.0
  %36 = vmatpush1.msra.mxu0 %v23
  %37 = vmatprep.subr.mxu0 0.0
  %38 = vmatpush1.msra.mxu0 %v24
  %39 = vmatprep.subr.mxu0 0.0
  %40 = vmatpush1.msra.mxu0 %v25
  %41 = vmatprep.subr.mxu0 0.0
  %42 = vmatpush1.msra.mxu0 0.0
  %43 = vmatprep.subr.mxu0 0.0
  %44 = vmatpush1.msra.mxu0 0.0
  %45 = vmatprep.subr.mxu0 0.0
  %46 = vmatpush1.msra.mxu0 0.0
  %47 = vmatprep.subr.mxu0 0.0
  %48 = vmatpush1.msra.mxu0 0.0
  %49 = vmatprep.subr.mxu0 0.0
  %50 = vmatpush1.msra.mxu0 0.0
  %51 = vmatprep.subr.mxu0 0.0
  %52 = vmatpush1.msra.mxu0 0.0
  %53 = vmatprep.subr.mxu0 0.0
  %54 = vmatpush1.msra.mxu0 0.0
  %55 = vmatprep.subr.mxu0 0.0
  %56 = vmatpush1.msra.mxu0 0.0
  %57 = vmatprep.subr.mxu0 0.0
  %58 = vmatpush1.msra.mxu0 0.0
  %59 = vmatprep.subr.mxu0 0.0
  %60 = vmatpush1.msra.mxu0 0.0
  %61 = vmatprep.subr.mxu0 0.0
  %62 = vmatpush1.msra.mxu0 0.0
  %63 = vmatprep.subr.mxu0 0.0
  %64 = vmatpush1.msra.mxu0 0.0
  %65 = vmatprep.subr.mxu0 0.0
  %66 = vmatpush1.msra.mxu0 0.0
  %67 = vmatprep.subr.mxu0 0.0
  %68 = vmatpush1.msra.mxu0 0.0
  %69 = vmatprep.subr.mxu0 0.0
  %70 = vmatpush1.msra.mxu0 0.0
  %71 = vmatprep.subr.mxu0 0.0
  %72 = vmatpush1.msra.mxu0 0.0
  %73 = vmatprep.subr.mxu0 0.0
  %74 = vmatpush1.msra.mxu0 0.0
  %75 = vmatprep.subr.mxu0 0.0
  %76 = vmatpush1.msra.mxu0 0.0
  %77 = vmatprep.subr.mxu0 0.0
  %78 = vmatpush1.msra.mxu0 0.0
  %79 = vmatprep.subr.mxu0 0.0
  %80 = vmatpush1.msra.mxu0 0.0
  %81 = vmatprep.subr.mxu0 0.0
  %82 = vmatpush1.msra.mxu0 0.0
  %83 = vmatprep.subr.mxu0 0.0
  %84 = vmatpush1.msra.mxu0 0.0
  %85 = vmatprep.subr.mxu0 0.0
  %86 = vmatpush1.msra.mxu0 0.0
  %87 = vmatprep.subr.mxu0 0.0
  %88 = vmatpush1.msra.mxu0 0.0
  %89 = vmatprep.subr.mxu0 0.0
  %90 = vmatpush1.msra.mxu0 0.0
  %91 = vmatprep.subr.mxu0 0.0
  %92 = vmatpush1.msra.mxu0 0.0
  %93 = vmatprep.subr.mxu0 0.0
  %94 = vmatpush1.msra.mxu0 0.0
  %95 = vmatprep.subr.mxu0 0.0
  %96 = vmatpush1.msra.mxu0 0.0
  %97 = vmatprep.mubr.f32.mxu0 0.0
  %98 = vmatmul.mubr.f32.gmra.mrb[0].mxu0 %v28
  %v99 = vpop.f32.mrb[0].mxu0
  %v100 = vadd.f32 0.0, %v99
  %v101 = vpop.f32.mrb[0].mxu0
  %102 = vmatprep.mubr.f32.mxu0 0.0
  %103 = vmatmul.mubr.f32.gmra.mrb[0].mxu0 %v31
  %v104 = vpop.f32.mrb[0].mxu0
  %v105 = vadd.f32 0.0, %v104
  %v106 = vpop.f32.mrb[0].mxu0
  %107 = vdwg.mxu0
  %v108 = vadd.f32 %v18, %v100
  %v109 = vadd.f32 %v19, %v105
  %vm110 = vcmask 785408
  %111 = vst.msk [vmem:[#allocation2] sm:$0xff] %vm110, %v108
  %112 = vst.msk [vmem:[#allocation2 + $0x8] sm:$0xff] %vm110, %v109
  // Predicated region
  $region14: #{gptj_attention_forward.3} parent=0 // pred_check
    %p113 = pneg %p11
  $region15: #{gptj_attention_forward.3} parent=0 // pred_check_branch
    %115 = sbr.rel (%p113) target = $region17
  $region16: #{gptj_attention_forward.3} parent=0 // pred_region
    %v116 = vld [vmem:[#allocation2] sm:$0xff]
    %v117 = vld [vmem:[#allocation2 + $0x8] sm:$0xff]
    %118 = vst.msk [vmem:[%s2] sm:$0xff] %vm110, %v116
    %119 = vst.msk [vmem:[%s2 + $0x8] sm:$0xff] %vm110, %v117
  $region17: #{gptj_attention_forward.3} parent=0 // pred_fallthru
    _
  // Predicated region
  $region18: #{gptj_attention_forward.3} parent=0 // pred_check
    _
  $region19: #{gptj_attention_forward.3} parent=0 // pred_check_branch
    %121 = sbr.rel (0) target = $region21
  $region20: #{gptj_attention_forward.3} parent=0 // pred_region
    _
  $region21: #{gptj_attention_forward.3} parent=0 // pred_fallthru
    _
  // Predicated region
  $region22: #{gptj_attention_forward.3} parent=0 // pred_check
    _
  $region23: #{gptj_attention_forward.3} parent=0 // pred_check_branch
    %123 = sbr.rel (0) target = $region25
  $region24: #{gptj_attention_forward.3} parent=0 // pred_region
    _
  $region25: #{gptj_attention_forward.3} parent=0 // pred_fallthru
    _

// kernel: gptj_attention_forward.5
$region0: #{gptj_attention_forward.5}
  #allocation0 [shape = 'u32[]', space=smem, size = 0x4, offset = 0x4, fixed_abs, tag = 'smem constant byte address 0x4 - core index']
  #allocation1 [shape = 'u32[144,128]{1,0:T(1,128)}', space=vmem, size = 0x12000, scoped, tag = 'internal scratch']
  #allocation2 [shape = 'f32[16,32]{1,0:T(8,128)}', space=vmem, size = 0x2000, scoped, tag = 'scratch operand']
  %s0 = inlined_call_operand.vmem [shape: f32[16,32], index: 0, kind: input, shape index: {}]
  %s1 = inlined_call_operand.vmem [shape: f32[32,32], index: 1, kind: input, shape index: {}]
  %s2 = inlined_call_operand.hbm [shape: f32[16,32], index: 2, kind: output, shape index: {}]
  %s3 = sld [smem:[#allocation0]]
  $region26: #{gptj_attention_forward.5} parent=0
    _
  %s5 = ssub.s32 1, %s3
  %s6 = scalar_select 0, %s5, %s3
  $region1: #{gptj_attention_forward.5} parent=0
    #allocation3 [shape = 'u8[8192]{0}', space=vmem, size = 0x2000, scoped, tag = 'output window, operand 0, single buffered']
    #allocation4 [shape = 's32[1]{0}', space=sflag, size = 0x4, scoped, tag = 'scoped memory for gptj_attention_forward.5']
    %7 = vsyncpa [#allocation4], 0
    // Predicated region
    $region2: #{gptj_attention_forward.5} parent=1 // pred_check
      _
    $region3: #{gptj_attention_forward.5} parent=1 // pred_check_branch
      %9 = sbr.rel (0) target = $region5
    $region4: #{gptj_attention_forward.5} parent=1 // pred_region
      _
    $region5: #{gptj_attention_forward.5} parent=1 // pred_fallthru
      _
    // Predicated region
    $region6: #{gptj_attention_forward.5} parent=1 // pred_check
      _
    $region7: #{gptj_attention_forward.5} parent=1 // pred_check_branch
      %11 = sbr.rel (0) target = $region9
    $region8: #{gptj_attention_forward.5} parent=1 // pred_region
      _
    $region9: #{gptj_attention_forward.5} parent=1 // pred_fallthru
      _
    %p12 = scmp.eq.s32.totalorder 0, 0
    // Predicated region
    $region10: #{gptj_attention_forward.5} parent=1 // pred_check
      %p13 = pneg %p12
    $region11: #{gptj_attention_forward.5} parent=1 // pred_check_branch
      %15 = sbr.rel (%p13) target = $region13
    $region12: #{gptj_attention_forward.5} parent=1 // pred_region
      %vm16 = vcmask 261120
      %17 = vst.msk [vmem:[#allocation2] sm:$0xff] %vm16, 0.0
      %18 = vst.msk [vmem:[#allocation2 + $0x8] sm:$0xff] %vm16, 0.0
    $region13: #{gptj_attention_forward.5} parent=1 // pred_fallthru
      _
    %v19 = vld [vmem:[#allocation2] sm:$0xff]
    %v20 = vld [vmem:[#allocation2 + $0x8] sm:$0xff]
    %v21 = vld [vmem:[%s0] sm:$0xff]
    %v22 = vld [vmem:[%s0 + $0x8] sm:$0xff]
    %v23 = vld [vmem:[%s1] sm:$0xff]
    %v24 = vld [vmem:[%s1 + $0x8] sm:$0xff]
    %v25 = vld [vmem:[%s1 + $0x10] sm:$0xff]
    %v26 = vld [vmem:[%s1 + $0x18] sm:$0xff]
    %vm27 = vcmask 261120
    %v29 = vsel %vm27, %v21, 0
    %v32 = vsel %vm27, %v22, 0
    %34 = vmatprep.subr.mxu0 0.0
    %35 = vmatpush1.msra.mxu0 %v23
    %36 = vmatprep.subr.mxu0 0.0
    %37 = vmatpush1.msra.mxu0 %v24
    %38 = vmatprep.subr.mxu0 0.0
    %39 = vmatpush1.msra.mxu0 %v25
    %40 = vmatprep.subr.mxu0 0.0
    %41 = vmatpush1.msra.mxu0 %v26
    %42 = vmatprep.subr.mxu0 0.0
    %43 = vmatpush1.msra.mxu0 0.0
    %44 = vmatprep.subr.mxu0 0.0
    %45 = vmatpush1.msra.mxu0 0.0
    %46 = vmatprep.subr.mxu0 0.0
    %47 = vmatpush1.msra.mxu0 0.0
    %48 = vmatprep.subr.mxu0 0.0
    %49 = vmatpush1.msra.mxu0 0.0
    %50 = vmatprep.subr.mxu0 0.0
    %51 = vmatpush1.msra.mxu0 0.0
    %52 = vmatprep.subr.mxu0 0.0
    %53 = vmatpush1.msra.mxu0 0.0
    %54 = vmatprep.subr.mxu0 0.0
    %55 = vmatpush1.msra.mxu0 0.0
    %56 = vmatprep.subr.mxu0 0.0
    %57 = vmatpush1.msra.mxu0 0.0
    %58 = vmatprep.subr.mxu0 0.0
    %59 = vmatpush1.msra.mxu0 0.0
    %60 = vmatprep.subr.mxu0 0.0
    %61 = vmatpush1.msra.mxu0 0.0
    %62 = vmatprep.subr.mxu0 0.0
    %63 = vmatpush1.msra.mxu0 0.0
    %64 = vmatprep.subr.mxu0 0.0
    %65 = vmatpush1.msra.mxu0 0.0
    %66 = vmatprep.subr.mxu0 0.0
    %67 = vmatpush1.msra.mxu0 0.0
    %68 = vmatprep.subr.mxu0 0.0
    %69 = vmatpush1.msra.mxu0 0.0
    %70 = vmatprep.subr.mxu0 0.0
    %71 = vmatpush1.msra.mxu0 0.0
    %72 = vmatprep.subr.mxu0 0.0
    %73 = vmatpush1.msra.mxu0 0.0
    %74 = vmatprep.subr.mxu0 0.0
    %75 = vmatpush1.msra.mxu0 0.0
    %76 = vmatprep.subr.mxu0 0.0
    %77 = vmatpush1.msra.mxu0 0.0
    %78 = vmatprep.subr.mxu0 0.0
    %79 = vmatpush1.msra.mxu0 0.0
    %80 = vmatprep.subr.mxu0 0.0
    %81 = vmatpush1.msra.mxu0 0.0
    %82 = vmatprep.subr.mxu0 0.0
    %83 = vmatpush1.msra.mxu0 0.0
    %84 = vmatprep.subr.mxu0 0.0
    %85 = vmatpush1.msra.mxu0 0.0
    %86 = vmatprep.subr.mxu0 0.0
    %87 = vmatpush1.msra.mxu0 0.0
    %88 = vmatprep.subr.mxu0 0.0
    %89 = vmatpush1.msra.mxu0 0.0
    %90 = vmatprep.subr.mxu0 0.0
    %91 = vmatpush1.msra.mxu0 0.0
    %92 = vmatprep.subr.mxu0 0.0
    %93 = vmatpush1.msra.mxu0 0.0
    %94 = vmatprep.subr.mxu0 0.0
    %95 = vmatpush1.msra.mxu0 0.0
    %96 = vmatprep.subr.mxu0 0.0
    %97 = vmatpush1.msra.mxu0 0.0
    %98 = vmatprep.mubr.f32.mxu0 0.0
    %99 = vmatmul.mubr.f32.gmra.mrb[0].mxu0 %v29
    %v100 = vpop.f32.mrb[0].mxu0
    %v101 = vadd.f32 0.0, %v100
    %v102 = vpop.f32.mrb[0].mxu0
    %103 = vmatprep.mubr.f32.mxu0 0.0
    %104 = vmatmul.mubr.f32.gmra.mrb[0].mxu0 %v32
    %v105 = vpop.f32.mrb[0].mxu0
    %v106 = vadd.f32 0.0, %v105
    %v107 = vpop.f32.mrb[0].mxu0
    %108 = vdwg.mxu0
    %v109 = vadd.f32 %v19, %v101
    %v110 = vadd.f32 %v20, %v106
    %111 = vst.msk [vmem:[#allocation2] sm:$0xff] %vm27, %v109
    %112 = vst.msk [vmem:[#allocation2 + $0x8] sm:$0xff] %vm27, %v110
    // Predicated region
    $region14: #{gptj_attention_forward.5} parent=1 // pred_check
      %p113 = pneg %p12
    $region15: #{gptj_attention_forward.5} parent=1 // pred_check_branch
      %115 = sbr.rel (%p113) target = $region17
    $region16: #{gptj_attention_forward.5} parent=1 // pred_region
      %v116 = vld [vmem:[#allocation2] sm:$0xff]
      %v117 = vld [vmem:[#allocation2 + $0x8] sm:$0xff]
      %118 = vst.msk [vmem:[#allocation3] sm:$0xff] %vm27, %v116
      %119 = vst.msk [vmem:[#allocation3 + $0x8] sm:$0xff] %vm27, %v117
    $region17: #{gptj_attention_forward.5} parent=1 // pred_fallthru
      _
    // Predicated region
    $region18: #{gptj_attention_forward.5} parent=1 // pred_check
      _
    $region19: #{gptj_attention_forward.5} parent=1 // pred_check_branch
      %121 = sbr.rel (0) target = $region21
    $region20: #{gptj_attention_forward.5} parent=1 // pred_region
      %s123 = ssub.s32 256, 256
      %124 = vsyncadd [#allocation4], %s123
      %s125 = sshll.u32 [#allocation3], 4
      %s126 = int_to_ptr.vmem [resolvable:$true] %s125
      %131 = dma.vmem_to_hbm [thread:$0]  %s126, 256, %s2, [#allocation4], 128, 128, 8
    $region21: #{gptj_attention_forward.5} parent=1 // pred_fallthru
      _
    // Predicated region
    $region22: #{gptj_attention_forward.5} parent=1 // pred_check
      _
    $region23: #{gptj_attention_forward.5} parent=1 // pred_check_branch
      %133 = sbr.rel (0) target = $region25
    $region24: #{gptj_attention_forward.5} parent=1 // pred_region
      %134 = dma.done [#allocation4], 256
    $region25: #{gptj_attention_forward.5} parent=1 // pred_fallthru
      _
    %135 = vsyncpa [#allocation4], 1

// kernel: gptj_attention_forward.4
$region0: #{gptj_attention_forward.4}
  #allocation0 [shape = 'u32[]', space=smem, size = 0x4, offset = 0x4, fixed_abs, tag = 'smem constant byte address 0x4 - core index']
  #allocation1 [shape = 'u32[144,128]{1,0:T(1,128)}', space=vmem, size = 0x12000, scoped, tag = 'internal scratch']
  #allocation2 [shape = 'f32[4,8,1]{2,1,0:T(8,128)}', space=vmem, size = 0x4000, scoped, tag = 'scratch operand']
  #allocation3 [shape = 'f32[4,8,1]{2,1,0:T(8,128)}', space=vmem, size = 0x4000, scoped, tag = 'scratch operand']
  #allocation4 [shape = 'f32[4,8,8]{2,1,0:T(8,128)}', space=vmem, size = 0x4000, scoped, tag = 'scratch operand']
  %s0 = inlined_call_operand.vmem [shape: f32[8,8,8], index: 0, kind: input, shape index: {}]
  %s1 = inlined_call_operand.vmem [shape: f32[8,8,8], index: 1, kind: input, shape index: {}]
  %s2 = inlined_call_operand.vmem [shape: f32[8,8,8], index: 2, kind: input, shape index: {}]
  %s3 = inlined_call_operand.vmem [shape: f32[8,8,8], index: 3, kind: output, shape index: {}]
  %s4 = sld [smem:[#allocation0]]
  $region57: #{gptj_attention_forward.4} parent=0
    _
  %s6 = ssub.s32 1, %s4
  %s7 = scalar_select 0, %s6, %s4
  loop: start=0, step=1, limit=4
  $region2: #{gptj_attention_forward.4} parent=0 // loop_pre_header
    _
  $region3: #{gptj_attention_forward.4} parent=0 // loop_header
    %s9 = sphi 0, %s13
    %p10 = scmp.ge.s32.totalorder %s9, 4
    %s16 = sphi 0, %s35
    %s17 = sphi 0, %s31
    %s18 = sphi 0, %s27
    %s19 = sphi 0, %s16
    %s20 = sphi 0, %s17
    %s21 = sphi 0, %s18
    %s22 = sphi 0, %s19
    %s23 = sphi 0, %s20
    %s24 = sphi 0, %s21
    %s40 = sphi 0, %s42
    %s43 = sphi 0, %s40
    %s44 = sphi 0, %s43
    %s60 = sphi 0, %s44
    %s68 = sphi 0, %s70
    %s71 = sphi 0, %s68
    %s72 = sphi 0, %s71
    %s88 = sphi 0, %s72
    %s96 = sphi 0, %s98
    %s99 = sphi 0, %s96
    %s100 = sphi 0, %s99
    %s116 = sphi 0, %s100
    %s124 = sphi 0, %s126
    %s127 = sphi 0, %s124
    %s128 = sphi 0, %s127
    %s144 = sphi 0, %s128
  $region4: #{gptj_attention_forward.4} parent=0 // loop_header_branch
    %12 = sbr.rel (%p10) target = $region8
  $region5: #{gptj_attention_forward.4} parent=0 // loop_body
    %s14 = ssub.s32 %s9, 1
    %s15 = ssub.s32 %s9, 2
    %s25 = sadd.s32 1, %s18
    %p26 = scmp.ge.s32.totalorder %s25, 1
    %s27 = scalar_select %p26, 0, %s25
    %s28 = sadd.s32 1, %s17
    %s29 = scalar_select %p26, %s28, %s17
    %p30 = scmp.ge.s32.totalorder %s29, 1
    %s31 = scalar_select %p30, 0, %s29
    %s32 = sadd.s32 1, %s16
    %s33 = scalar_select %p30, %s32, %s16
    %p34 = scmp.ge.s32.totalorder %s33, 2
    %s35 = scalar_select %p34, 0, %s33
    %s36 = ssub.s32 %s16, %s35
    %s37 = ssub.s32 %s17, %s31
    %s38 = sor.u32 %s36, %s37
    %p39 = scmp.eq.s32.totalorder %s38, 0
    %s41 = sadd.s32 %s40, 1
    %s42 = scalar_select %p39, %s40, %s41
    %p45 = pneg %p39
    %p46 = scmp.eq.s32.totalorder %s9, 1
    %p47 = por %p45, %p46
    %p48 = scmp.ne.s32.totalorder %s40, %s43
    %p49 = scmp.eq.s32.totalorder %s9, 0
    %p50 = por %p48, %p49
    %p51 = scmp.ne.s32.totalorder %s40, %s43
    %p52 = scmp.eq.s32.totalorder %s14, 1
    %p53 = por %p51, %p52
    %p54 = scmp.ne.s32.totalorder %s43, %s44
    %p55 = scmp.eq.s32.totalorder %s14, 0
    %p56 = por %p54, %p55
    %p57 = scmp.ne.s32.totalorder %s43, %s44
    %p58 = scmp.eq.s32.totalorder %s15, 1
    %p59 = por %p57, %p58
    %p61 = scmp.ne.s32.totalorder %s44, %s60
    %p62 = scmp.eq.s32.totalorder %s15, 0
    %p63 = por %p61, %p62
    %s64 = ssub.s32 %s16, %s35
    %s65 = ssub.s32 %s18, %s27
    %s66 = sor.u32 %s64, %s65
    %p67 = scmp.eq.s32.totalorder %s66, 0
    %s69 = sadd.s32 %s68, 1
    %s70 = scalar_select %p67, %s68, %s69
    %p73 = pneg %p67
    %p74 = scmp.eq.s32.totalorder %s9, 1
    %p75 = por %p73, %p74
    %p76 = scmp.ne.s32.totalorder %s68, %s71
    %p77 = scmp.eq.s32.totalorder %s9, 0
    %p78 = por %p76, %p77
    %p79 = scmp.ne.s32.totalorder %s68, %s71
    %p80 = scmp.eq.s32.totalorder %s14, 1
    %p81 = por %p79, %p80
    %p82 = scmp.ne.s32.totalorder %s71, %s72
    %p83 = scmp.eq.s32.totalorder %s14, 0
    %p84 = por %p82, %p83
    %p85 = scmp.ne.s32.totalorder %s71, %s72
    %p86 = scmp.eq.s32.totalorder %s15, 1
    %p87 = por %p85, %p86
    %p89 = scmp.ne.s32.totalorder %s72, %s88
    %p90 = scmp.eq.s32.totalorder %s15, 0
    %p91 = por %p89, %p90
    %s92 = ssub.s32 %s16, %s35
    %s93 = ssub.s32 %s18, %s27
    %s94 = sor.u32 %s92, %s93
    %p95 = scmp.eq.s32.totalorder %s94, 0
    %s97 = sadd.s32 %s96, 1
    %s98 = scalar_select %p95, %s96, %s97
    %p101 = pneg %p95
    %p102 = scmp.eq.s32.totalorder %s9, 1
    %p103 = por %p101, %p102
    %p104 = scmp.ne.s32.totalorder %s96, %s99
    %p105 = scmp.eq.s32.totalorder %s9, 0
    %p106 = por %p104, %p105
    %p107 = scmp.ne.s32.totalorder %s96, %s99
    %p108 = scmp.eq.s32.totalorder %s14, 1
    %p109 = por %p107, %p108
    %p110 = scmp.ne.s32.totalorder %s99, %s100
    %p111 = scmp.eq.s32.totalorder %s14, 0
    %p112 = por %p110, %p111
    %p113 = scmp.ne.s32.totalorder %s99, %s100
    %p114 = scmp.eq.s32.totalorder %s15, 1
    %p115 = por %p113, %p114
    %p117 = scmp.ne.s32.totalorder %s100, %s116
    %p118 = scmp.eq.s32.totalorder %s15, 0
    %p119 = por %p117, %p118
    %s120 = ssub.s32 %s16, %s35
    %s121 = ssub.s32 %s17, %s31
    %s122 = sor.u32 %s120, %s121
    %p123 = scmp.eq.s32.totalorder %s122, 0
    %s125 = sadd.s32 %s124, 1
    %s126 = scalar_select %p123, %s124, %s125
    %p129 = pneg %p123
    %p130 = scmp.eq.s32.totalorder %s9, 1
    %p131 = por %p129, %p130
    %p132 = scmp.ne.s32.totalorder %s124, %s127
    %p133 = scmp.eq.s32.totalorder %s9, 0
    %p134 = por %p132, %p133
    %p135 = scmp.ne.s32.totalorder %s124, %s127
    %p136 = scmp.eq.s32.totalorder %s14, 1
    %p137 = por %p135, %p136
    %p138 = scmp.ne.s32.totalorder %s127, %s128
    %p139 = scmp.eq.s32.totalorder %s14, 0
    %p140 = por %p138, %p139
    %p141 = scmp.ne.s32.totalorder %s127, %s128
    %p142 = scmp.eq.s32.totalorder %s15, 1
    %p143 = por %p141, %p142
    %p145 = scmp.ne.s32.totalorder %s128, %s144
    %p146 = scmp.eq.s32.totalorder %s15, 0
    %p147 = por %p145, %p146
    %p148 = scmp.le.s32.totalorder 1, %s9
    %p149 = scmp.lt.s32.totalorder %s9, 3
    %p150 = pnand %p148, %p149
    %p151 = pneg %p150
    // Predicated region
    $region9: #{gptj_attention_forward.4} parent=5 // pred_check
      _
    $region10: #{gptj_attention_forward.4} parent=5 // pred_check_branch
      %153 = sbr.rel (%p150) target = $region12
    $region11: #{gptj_attention_forward.4} parent=5 // pred_region
      %s154 = ssub.s32 %s9, 1
    $region12: #{gptj_attention_forward.4} parent=5 // pred_fallthru
      _
    %p155 = scmp.lt.s32.totalorder %s9, 2
    // Predicated region
    $region13: #{gptj_attention_forward.4} parent=5 // pred_check
      %p156 = pneg %p155
    $region14: #{gptj_attention_forward.4} parent=5 // pred_check_branch
      %158 = sbr.rel (%p156) target = $region16
    $region15: #{gptj_attention_forward.4} parent=5 // pred_region
      // Predicated region
      $region17: #{gptj_attention_forward.4} parent=15 // pred_check
        %p159 = pneg %p50
      $region18: #{gptj_attention_forward.4} parent=15 // pred_check_branch
        %161 = sbr.rel (%p159) target = $region20
      $region19: #{gptj_attention_forward.4} parent=15 // pred_region
        %s162 = smul.u32 4, %s16
        %p163 = scmp.lt.s32.totalorder %s162, 7
        %s164 = scalar_select %p163, %s162, 7
        %p165 = scmp.lt.s32.totalorder %s17, 0
        %s166 = scalar_select %p165, %s17, 0
        %s167 = sadd.s32 %s166, %s164
        %s168 = smul.addr %s167, 8
        %s169 = scalar_lea.vmem %s0, %s168
        %s170 = smul.u32 4, %s16
      $region20: #{gptj_attention_forward.4} parent=15 // pred_fallthru
        _
      // Predicated region
      $region21: #{gptj_attention_forward.4} parent=15 // pred_check
        %p171 = pneg %p78
      $region22: #{gptj_attention_forward.4} parent=15 // pred_check_branch
        %173 = sbr.rel (%p171) target = $region24
      $region23: #{gptj_attention_forward.4} parent=15 // pred_region
        %s174 = smul.u32 4, %s16
        %p175 = scmp.lt.s32.totalorder %s174, 7
        %s176 = scalar_select %p175, %s174, 7
        %p177 = scmp.lt.s32.totalorder %s18, 0
        %s178 = scalar_select %p177, %s18, 0
        %s179 = sadd.s32 %s178, %s176
        %s180 = smul.addr %s179, 8
        %s181 = scalar_lea.vmem %s1, %s180
        %s182 = smul.u32 4, %s16
      $region24: #{gptj_attention_forward.4} parent=15 // pred_fallthru
        _
      // Predicated region
      $region25: #{gptj_attention_forward.4} parent=15 // pred_check
        %p183 = pneg %p106
      $region26: #{gptj_attention_forward.4} parent=15 // pred_check_branch
        %185 = sbr.rel (%p183) target = $region28
      $region27: #{gptj_attention_forward.4} parent=15 // pred_region
        %s186 = smul.u32 4, %s16
        %p187 = scmp.lt.s32.totalorder %s186, 7
        %s188 = scalar_select %p187, %s186, 7
        %p189 = scmp.lt.s32.totalorder %s18, 0
        %s190 = scalar_select %p189, %s18, 0
        %s191 = sadd.s32 %s190, %s188
        %s192 = smul.addr %s191, 8
        %s193 = scalar_lea.vmem %s2, %s192
        %s194 = smul.u32 4, %s16
      $region28: #{gptj_attention_forward.4} parent=15 // pred_fallthru
        _
    $region16: #{gptj_attention_forward.4} parent=5 // pred_fallthru
      _
    %p195 = scmp.le.s32.totalorder 1, %s9
    %p196 = scmp.lt.s32.totalorder %s9, 3
    %p197 = pnand %p195, %p196
    %p198 = pneg %p197
    // Predicated region
    $region29: #{gptj_attention_forward.4} parent=5 // pred_check
      _
    $region30: #{gptj_attention_forward.4} parent=5 // pred_check_branch
      %200 = sbr.rel (%p197) target = $region32
    $region31: #{gptj_attention_forward.4} parent=5 // pred_region
      %s201 = ssub.s32 %s9, 1
      %s202 = smul.u32 4, %s19
      %p203 = scmp.lt.s32.totalorder %s202, 7
      %s204 = scalar_select %p203, %s202, 7
      %p205 = scmp.lt.s32.totalorder %s20, 0
      %s206 = scalar_select %p205, %s20, 0
      %s207 = sadd.s32 %s206, %s204
      %s208 = smul.addr %s207, 8
      %s209 = scalar_lea.vmem %s0, %s208
      %p210 = pneg %p56
      %p211 = pneg %p53
      %s212 = smul.u32 4, %s19
      %p213 = scmp.lt.s32.totalorder %s212, 7
      %s214 = scalar_select %p213, %s212, 7
      %p215 = scmp.lt.s32.totalorder %s21, 0
      %s216 = scalar_select %p215, %s21, 0
      %s217 = sadd.s32 %s216, %s214
      %s218 = smul.addr %s217, 8
      %s219 = scalar_lea.vmem %s1, %s218
      %p220 = pneg %p84
      %p221 = pneg %p81
      %s222 = smul.u32 4, %s19
      %p223 = scmp.lt.s32.totalorder %s222, 7
      %s224 = scalar_select %p223, %s222, 7
      %p225 = scmp.lt.s32.totalorder %s21, 0
      %s226 = scalar_select %p225, %s21, 0
      %s227 = sadd.s32 %s226, %s224
      %s228 = smul.addr %s227, 8
      %s229 = scalar_lea.vmem %s2, %s228
      %p230 = pneg %p112
      %p231 = pneg %p109
      %p232 = pneg %p140
      %p233 = pneg %p137
      %s234 = smul.u32 4, %s19
      %p235 = scmp.lt.s32.totalorder %s234, 7
      %s236 = scalar_select %p235, %s234, 7
      %p237 = scmp.lt.s32.totalorder %s20, 0
      %s238 = scalar_select %p237, %s20, 0
      %s239 = sadd.s32 %s238, %s236
      %s240 = smul.addr %s239, 8
      %s241 = scalar_lea.vmem %s3, %s240
      %s242 = smul.u32 4, %s19
      %p243 = scmp.lt.s32.totalorder %s242, 7
      %s244 = scalar_select %p243, %s242, 7
      %p245 = scmp.lt.s32.totalorder %s20, 0
      %s246 = scalar_select %p245, %s20, 0
      %s247 = sadd.s32 %s246, %s244
      %s248 = smul.addr %s247, 8
      %s249 = scalar_lea.vmem %s0, %s248
      %s250 = smul.u32 4, %s19
      %s251 = smul.u32 4, %s19
      %p252 = scmp.lt.s32.totalorder %s251, 7
      %s253 = scalar_select %p252, %s251, 7
      %p254 = scmp.lt.s32.totalorder %s21, 0
      %s255 = scalar_select %p254, %s21, 0
      %s256 = sadd.s32 %s255, %s253
      %s257 = smul.addr %s256, 8
      %s258 = scalar_lea.vmem %s1, %s257
      %s259 = smul.u32 4, %s19
      %s260 = smul.u32 4, %s19
      %p261 = scmp.lt.s32.totalorder %s260, 7
      %s262 = scalar_select %p261, %s260, 7
      %p263 = scmp.lt.s32.totalorder %s21, 0
      %s264 = scalar_select %p263, %s21, 0
      %s265 = sadd.s32 %s264, %s262
      %s266 = smul.addr %s265, 8
      %s267 = scalar_lea.vmem %s2, %s266
      %s268 = smul.u32 4, %s19
      %s269 = smul.u32 4, %s19
      %p270 = scmp.lt.s32.totalorder %s269, 7
      %s271 = scalar_select %p270, %s269, 7
      %p272 = scmp.lt.s32.totalorder %s20, 0
      %s273 = scalar_select %p272, %s20, 0
      %s274 = sadd.s32 %s273, %s271
      %s275 = smul.addr %s274, 8
      %s276 = scalar_lea.vmem %s3, %s275
      %s277 = smul.u32 4, %s19
      %p278 = scmp.eq.s32.totalorder %s21, 0
      // Predicated region
      $region33: #{gptj_attention_forward.4} parent=31 // pred_check
        %p279 = pneg %p278
      $region34: #{gptj_attention_forward.4} parent=31 // pred_check_branch
        %281 = sbr.rel (%p279) target = $region36
      $region35: #{gptj_attention_forward.4} parent=31 // pred_region
        %vm282 = vcmask 7168
        %283 = vst.msk [vmem:[#allocation2] sm:$0xff] %vm282, -inf
        %284 = vst.msk [vmem:[#allocation2 + $0x8] sm:$0xff] %vm282, -inf
        %285 = vst.msk [vmem:[#allocation2 + $0x10] sm:$0xff] %vm282, -inf
        %286 = vst.msk [vmem:[#allocation2 + $0x18] sm:$0xff] %vm282, -inf
        %287 = vst.msk [vmem:[#allocation3] sm:$0xff] %vm282, 0.0
        %288 = vst.msk [vmem:[#allocation3 + $0x8] sm:$0xff] %vm282, 0.0
        %289 = vst.msk [vmem:[#allocation3 + $0x10] sm:$0xff] %vm282, 0.0
        %290 = vst.msk [vmem:[#allocation3 + $0x18] sm:$0xff] %vm282, 0.0
        %vm291 = vcmask 64512
        %292 = vst.msk [vmem:[#allocation4] sm:$0xff] %vm291, 0.0
        %293 = vst.msk [vmem:[#allocation4 + $0x8] sm:$0xff] %vm291, 0.0
        %294 = vst.msk [vmem:[#allocation4 + $0x10] sm:$0xff] %vm291, 0.0
        %295 = vst.msk [vmem:[#allocation4 + $0x18] sm:$0xff] %vm291, 0.0
      $region36: #{gptj_attention_forward.4} parent=31 // pred_fallthru
        _
      %p296 = scmp.le.s32.totalorder %s21, %s20
      // Predicated region
      $region37: #{gptj_attention_forward.4} parent=31 // pred_check
        %p297 = pneg %p296
      $region38: #{gptj_attention_forward.4} parent=31 // pred_check_branch
        %299 = sbr.rel (%p297) target = $region40
      $region39: #{gptj_attention_forward.4} parent=31 // pred_region
        %v300 = vld [vmem:[%s249] sm:$0xff]
        %v301 = vld [vmem:[%s249 + $0x8] sm:$0xff]
        %v302 = vld [vmem:[%s249 + $0x10] sm:$0xff]
        %v303 = vld [vmem:[%s249 + $0x18] sm:$0xff]
        %v304 = vld [vmem:[%s258] sm:$0xff]
        %v305 = vld [vmem:[%s258 + $0x8] sm:$0xff]
        %v306 = vld [vmem:[%s258 + $0x10] sm:$0xff]
        %v307 = vld [vmem:[%s258 + $0x18] sm:$0xff]
        %vm308 = vcmask 64512
        %v310 = vsel %vm308, %v300, 0
        %v313 = vsel %vm308, %v304, 0
        %315 = vmatprep.subr.mxu0 0.0
        %316 = vmatpush1.xpose.msra.mxu0 %v313
        %317 = vmatprep.subr.mxu0 0.0
        %318 = vmatpush1.xpose.msra.mxu0 0.0
        %319 = vmatprep.subr.mxu0 0.0
        %320 = vmatpush1.xpose.msra.mxu0 0.0
        %321 = vmatprep.subr.mxu0 0.0
        %322 = vmatpush1.xpose.msra.mxu0 0.0
        %323 = vmatprep.subr.mxu0 0.0
        %324 = vmatpush1.xpose.msra.mxu0 0.0
        %325 = vmatprep.subr.mxu0 0.0
        %326 = vmatpush1.xpose.msra.mxu0 0.0
        %327 = vmatprep.subr.mxu0 0.0
        %328 = vmatpush1.xpose.msra.mxu0 0.0
        %329 = vmatprep.subr.mxu0 0.0
        %330 = vmatpush1.xpose.msra.mxu0 0.0
        %331 = vmatprep.subr.mxu0 0.0
        %332 = vmatpush1.xpose.msra.mxu0 0.0
        %333 = vmatprep.subr.mxu0 0.0
        %334 = vmatpush1.xpose.msra.mxu0 0.0
        %335 = vmatprep.subr.mxu0 0.0
        %336 = vmatpush1.xpose.msra.mxu0 0.0
        %337 = vmatprep.subr.mxu0 0.0
        %338 = vmatpush1.xpose.msra.mxu0 0.0
        %339 = vmatprep.subr.mxu0 0.0
        %340 = vmatpush1.xpose.msra.mxu0 0.0
        %341 = vmatprep.subr.mxu0 0.0
        %342 = vmatpush1.xpose.msra.mxu0 0.0
        %343 = vmatprep.subr.mxu0 0.0
        %344 = vmatpush1.xpose.msra.mxu0 0.0
        %345 = vmatprep.subr.mxu0 0.0
        %346 = vmatpush1.xpose.msra.mxu0 0.0
        %347 = vmatprep.subr.mxu0 0.0
        %348 = vmatpush1.xpose.msra.mxu0 0.0
        %349 = vmatprep.subr.mxu0 0.0
        %350 = vmatpush1.xpose.msra.mxu0 0.0
        %351 = vmatprep.subr.mxu0 0.0
        %352 = vmatpush1.xpose.msra.mxu0 0.0
        %353 = vmatprep.subr.mxu0 0.0
        %354 = vmatpush1.xpose.msra.mxu0 0.0
        %355 = vmatprep.subr.mxu0 0.0
        %356 = vmatpush1.xpose.msra.mxu0 0.0
        %357 = vmatprep.subr.mxu0 0.0
        %358 = vmatpush1.xpose.msra.mxu0 0.0
        %359 = vmatprep.subr.mxu0 0.0
        %360 = vmatpush1.xpose.msra.mxu0 0.0
        %361 = vmatprep.subr.mxu0 0.0
        %362 = vmatpush1.xpose.msra.mxu0 0.0
        %363 = vmatprep.subr.mxu0 0.0
        %364 = vmatpush1.xpose.msra.mxu0 0.0
        %365 = vmatprep.subr.mxu0 0.0
        %366 = vmatpush1.xpose.msra.mxu0 0.0
        %367 = vmatprep.subr.mxu0 0.0
        %368 = vmatpush1.xpose.msra.mxu0 0.0
        %369 = vmatprep.subr.mxu0 0.0
        %370 = vmatpush1.xpose.msra.mxu0 0.0
        %371 = vmatprep.subr.mxu0 0.0
        %372 = vmatpush1.xpose.msra.mxu0 0.0
        %373 = vmatprep.subr.mxu0 0.0
        %374 = vmatpush1.xpose.msra.mxu0 0.0
        %375 = vmatprep.subr.mxu0 0.0
        %376 = vmatpush1.xpose.msra.mxu0 0.0
        %377 = vmatprep.subr.mxu0 0.0
        %378 = vmatpush1.xpose.msra.mxu0 0.0
        %379 = vmatprep.mubr.f32.mxu0 0.0
        %380 = vmatmul.mubr.f32.gmra.mrb[0].mxu0 %v310
        %v381 = vpop.f32.mrb[0].mxu0
        %v382 = vadd.f32 0.0, %v381
        %v383 = vpop.f32.mrb[0].mxu0
        %384 = vdwg.mxu0
        %v386 = vsel %vm308, %v301, 0
        %v389 = vsel %vm308, %v305, 0
        %391 = vmatprep.subr.mxu0 0.0
        %392 = vmatpush1.xpose.msra.mxu0 %v389
        %393 = vmatprep.subr.mxu0 0.0
        %394 = vmatpush1.xpose.msra.mxu0 0.0
        %395 = vmatprep.subr.mxu0 0.0
        %396 = vmatpush1.xpose.msra.mxu0 0.0
        %397 = vmatprep.subr.mxu0 0.0
        %398 = vmatpush1.xpose.msra.mxu0 0.0
        %399 = vmatprep.subr.mxu0 0.0
        %400 = vmatpush1.xpose.msra.mxu0 0.0
        %401 = vmatprep.subr.mxu0 0.0
        %402 = vmatpush1.xpose.msra.mxu0 0.0
        %403 = vmatprep.subr.mxu0 0.0
        %404 = vmatpush1.xpose.msra.mxu0 0.0
        %405 = vmatprep.subr.mxu0 0.0
        %406 = vmatpush1.xpose.msra.mxu0 0.0
        %407 = vmatprep.subr.mxu0 0.0
        %408 = vmatpush1.xpose.msra.mxu0 0.0
        %409 = vmatprep.subr.mxu0 0.0
        %410 = vmatpush1.xpose.msra.mxu0 0.0
        %411 = vmatprep.subr.mxu0 0.0
        %412 = vmatpush1.xpose.msra.mxu0 0.0
        %413 = vmatprep.subr.mxu0 0.0
        %414 = vmatpush1.xpose.msra.mxu0 0.0
        %415 = vmatprep.subr.mxu0 0.0
        %416 = vmatpush1.xpose.msra.mxu0 0.0
        %417 = vmatprep.subr.mxu0 0.0
        %418 = vmatpush1.xpose.msra.mxu0 0.0
        %419 = vmatprep.subr.mxu0 0.0
        %420 = vmatpush1.xpose.msra.mxu0 0.0
        %421 = vmatprep.subr.mxu0 0.0
        %422 = vmatpush1.xpose.msra.mxu0 0.0
        %423 = vmatprep.subr.mxu0 0.0
        %424 = vmatpush1.xpose.msra.mxu0 0.0
        %425 = vmatprep.subr.mxu0 0.0
        %426 = vmatpush1.xpose.msra.mxu0 0.0
        %427 = vmatprep.subr.mxu0 0.0
        %428 = vmatpush1.xpose.msra.mxu0 0.0
        %429 = vmatprep.subr.mxu0 0.0
        %430 = vmatpush1.xpose.msra.mxu0 0.0
        %431 = vmatprep.subr.mxu0 0.0
        %432 = vmatpush1.xpose.msra.mxu0 0.0
        %433 = vmatprep.subr.mxu0 0.0
        %434 = vmatpush1.xpose.msra.mxu0 0.0
        %435 = vmatprep.subr.mxu0 0.0
        %436 = vmatpush1.xpose.msra.mxu0 0.0
        %437 = vmatprep.subr.mxu0 0.0
        %438 = vmatpush1.xpose.msra.mxu0 0.0
        %439 = vmatprep.subr.mxu0 0.0
        %440 = vmatpush1.xpose.msra.mxu0 0.0
        %441 = vmatprep.subr.mxu0 0.0
        %442 = vmatpush1.xpose.msra.mxu0 0.0
        %443 = vmatprep.subr.mxu0 0.0
        %444 = vmatpush1.xpose.msra.mxu0 0.0
        %445 = vmatprep.subr.mxu0 0.0
        %446 = vmatpush1.xpose.msra.mxu0 0.0
        %447 = vmatprep.subr.mxu0 0.0
        %448 = vmatpush1.xpose.msra.mxu0 0.0
        %449 = vmatprep.subr.mxu0 0.0
        %450 = vmatpush1.xpose.msra.mxu0 0.0
        %451 = vmatprep.subr.mxu0 0.0
        %452 = vmatpush1.xpose.msra.mxu0 0.0
        %453 = vmatprep.subr.mxu0 0.0
        %454 = vmatpush1.xpose.msra.mxu0 0.0
        %455 = vmatprep.mubr.f32.mxu0 0.0
        %456 = vmatmul.mubr.f32.gmra.mrb[0].mxu0 %v386
        %v457 = vpop.f32.mrb[0].mxu0
        %v458 = vadd.f32 0.0, %v457
        %v459 = vpop.f32.mrb[0].mxu0
        %460 = vdwg.mxu0
        %v462 = vsel %vm308, %v302, 0
        %v465 = vsel %vm308, %v306, 0
        %467 = vmatprep.subr.mxu0 0.0
        %468 = vmatpush1.xpose.msra.mxu0 %v465
        %469 = vmatprep.subr.mxu0 0.0
        %470 = vmatpush1.xpose.msra.mxu0 0.0
        %471 = vmatprep.subr.mxu0 0.0
        %472 = vmatpush1.xpose.msra.mxu0 0.0
        %473 = vmatprep.subr.mxu0 0.0
        %474 = vmatpush1.xpose.msra.mxu0 0.0
        %475 = vmatprep.subr.mxu0 0.0
        %476 = vmatpush1.xpose.msra.mxu0 0.0
        %477 = vmatprep.subr.mxu0 0.0
        %478 = vmatpush1.xpose.msra.mxu0 0.0
        %479 = vmatprep.subr.mxu0 0.0
        %480 = vmatpush1.xpose.msra.mxu0 0.0
        %481 = vmatprep.subr.mxu0 0.0
        %482 = vmatpush1.xpose.msra.mxu0 0.0
        %483 = vmatprep.subr.mxu0 0.0
        %484 = vmatpush1.xpose.msra.mxu0 0.0
        %485 = vmatprep.subr.mxu0 0.0
        %486 = vmatpush1.xpose.msra.mxu0 0.0
        %487 = vmatprep.subr.mxu0 0.0
        %488 = vmatpush1.xpose.msra.mxu0 0.0
        %489 = vmatprep.subr.mxu0 0.0
        %490 = vmatpush1.xpose.msra.mxu0 0.0
        %491 = vmatprep.subr.mxu0 0.0
        %492 = vmatpush1.xpose.msra.mxu0 0.0
        %493 = vmatprep.subr.mxu0 0.0
        %494 = vmatpush1.xpose.msra.mxu0 0.0
        %495 = vmatprep.subr.mxu0 0.0
        %496 = vmatpush1.xpose.msra.mxu0 0.0
        %497 = vmatprep.subr.mxu0 0.0
        %498 = vmatpush1.xpose.msra.mxu0 0.0
        %499 = vmatprep.subr.mxu0 0.0
        %500 = vmatpush1.xpose.msra.mxu0 0.0
        %501 = vmatprep.subr.mxu0 0.0
        %502 = vmatpush1.xpose.msra.mxu0 0.0
        %503 = vmatprep.subr.mxu0 0.0
        %504 = vmatpush1.xpose.msra.mxu0 0.0
        %505 = vmatprep.subr.mxu0 0.0
        %506 = vmatpush1.xpose.msra.mxu0 0.0
        %507 = vmatprep.subr.mxu0 0.0
        %508 = vmatpush1.xpose.msra.mxu0 0.0
        %509 = vmatprep.subr.mxu0 0.0
        %510 = vmatpush1.xpose.msra.mxu0 0.0
        %511 = vmatprep.subr.mxu0 0.0
        %512 = vmatpush1.xpose.msra.mxu0 0.0
        %513 = vmatprep.subr.mxu0 0.0
        %514 = vmatpush1.xpose.msra.mxu0 0.0
        %515 = vmatprep.subr.mxu0 0.0
        %516 = vmatpush1.xpose.msra.mxu0 0.0
        %517 = vmatprep.subr.mxu0 0.0
        %518 = vmatpush1.xpose.msra.mxu0 0.0
        %519 = vmatprep.subr.mxu0 0.0
        %520 = vmatpush1.xpose.msra.mxu0 0.0
        %521 = vmatprep.subr.mxu0 0.0
        %522 = vmatpush1.xpose.msra.mxu0 0.0
        %523 = vmatprep.subr.mxu0 0.0
        %524 = vmatpush1.xpose.msra.mxu0 0.0
        %525 = vmatprep.subr.mxu0 0.0
        %526 = vmatpush1.xpose.msra.mxu0 0.0
        %527 = vmatprep.subr.mxu0 0.0
        %528 = vmatpush1.xpose.msra.mxu0 0.0
        %529 = vmatprep.subr.mxu0 0.0
        %530 = vmatpush1.xpose.msra.mxu0 0.0
        %531 = vmatprep.mubr.f32.mxu0 0.0
        %532 = vmatmul.mubr.f32.gmra.mrb[0].mxu0 %v462
        %v533 = vpop.f32.mrb[0].mxu0
        %v534 = vadd.f32 0.0, %v533
        %v535 = vpop.f32.mrb[0].mxu0
        %536 = vdwg.mxu0
        %v538 = vsel %vm308, %v303, 0
        %v541 = vsel %vm308, %v307, 0
        %543 = vmatprep.subr.mxu0 0.0
        %544 = vmatpush1.xpose.msra.mxu0 %v541
        %545 = vmatprep.subr.mxu0 0.0
        %546 = vmatpush1.xpose.msra.mxu0 0.0
        %547 = vmatprep.subr.mxu0 0.0
        %548 = vmatpush1.xpose.msra.mxu0 0.0
        %549 = vmatprep.subr.mxu0 0.0
        %550 = vmatpush1.xpose.msra.mxu0 0.0
        %551 = vmatprep.subr.mxu0 0.0
        %552 = vmatpush1.xpose.msra.mxu0 0.0
        %553 = vmatprep.subr.mxu0 0.0
        %554 = vmatpush1.xpose.msra.mxu0 0.0
        %555 = vmatprep.subr.mxu0 0.0
        %556 = vmatpush1.xpose.msra.mxu0 0.0
        %557 = vmatprep.subr.mxu0 0.0
        %558 = vmatpush1.xpose.msra.mxu0 0.0
        %559 = vmatprep.subr.mxu0 0.0
        %560 = vmatpush1.xpose.msra.mxu0 0.0
        %561 = vmatprep.subr.mxu0 0.0
        %562 = vmatpush1.xpose.msra.mxu0 0.0
        %563 = vmatprep.subr.mxu0 0.0
        %564 = vmatpush1.xpose.msra.mxu0 0.0
        %565 = vmatprep.subr.mxu0 0.0
        %566 = vmatpush1.xpose.msra.mxu0 0.0
        %567 = vmatprep.subr.mxu0 0.0
        %568 = vmatpush1.xpose.msra.mxu0 0.0
        %569 = vmatprep.subr.mxu0 0.0
        %570 = vmatpush1.xpose.msra.mxu0 0.0
        %571 = vmatprep.subr.mxu0 0.0
        %572 = vmatpush1.xpose.msra.mxu0 0.0
        %573 = vmatprep.subr.mxu0 0.0
        %574 = vmatpush1.xpose.msra.mxu0 0.0
        %575 = vmatprep.subr.mxu0 0.0
        %576 = vmatpush1.xpose.msra.mxu0 0.0
        %577 = vmatprep.subr.mxu0 0.0
        %578 = vmatpush1.xpose.msra.mxu0 0.0
        %579 = vmatprep.subr.mxu0 0.0
        %580 = vmatpush1.xpose.msra.mxu0 0.0
        %581 = vmatprep.subr.mxu0 0.0
        %582 = vmatpush1.xpose.msra.mxu0 0.0
        %583 = vmatprep.subr.mxu0 0.0
        %584 = vmatpush1.xpose.msra.mxu0 0.0
        %585 = vmatprep.subr.mxu0 0.0
        %586 = vmatpush1.xpose.msra.mxu0 0.0
        %587 = vmatprep.subr.mxu0 0.0
        %588 = vmatpush1.xpose.msra.mxu0 0.0
        %589 = vmatprep.subr.mxu0 0.0
        %590 = vmatpush1.xpose.msra.mxu0 0.0
        %591 = vmatprep.subr.mxu0 0.0
        %592 = vmatpush1.xpose.msra.mxu0 0.0
        %593 = vmatprep.subr.mxu0 0.0
        %594 = vmatpush1.xpose.msra.mxu0 0.0
        %595 = vmatprep.subr.mxu0 0.0
        %596 = vmatpush1.xpose.msra.mxu0 0.0
        %597 = vmatprep.subr.mxu0 0.0
        %598 = vmatpush1.xpose.msra.mxu0 0.0
        %599 = vmatprep.subr.mxu0 0.0
        %600 = vmatpush1.xpose.msra.mxu0 0.0
        %601 = vmatprep.subr.mxu0 0.0
        %602 = vmatpush1.xpose.msra.mxu0 0.0
        %603 = vmatprep.subr.mxu0 0.0
        %604 = vmatpush1.xpose.msra.mxu0 0.0
        %605 = vmatprep.subr.mxu0 0.0
        %606 = vmatpush1.xpose.msra.mxu0 0.0
        %607 = vmatprep.mubr.f32.mxu0 0.0
        %608 = vmatmul.mubr.f32.gmra.mrb[0].mxu0 %v538
        %v609 = vpop.f32.mrb[0].mxu0
        %v610 = vadd.f32 0.0, %v609
        %v611 = vpop.f32.mrb[0].mxu0
        %612 = vdwg.mxu0
        %v613 = vmul.f32 %v382, 0.35355338
        %v614 = vmul.f32 %v458, 0.35355338
        %v615 = vmul.f32 %v534, 0.35355338
        %v616 = vmul.f32 %v610, 0.35355338
        %s617 = smul.u32 %s20, 8
        %v618 = vlaneseq
        %v619 = vshrl.u32 %v618, 7
        %v620 = vstv %s617
        %v621 = vadd.s32 %v620, %v619
        %s622 = smul.u32 %s21, 8
        %v623 = vlaneseq
        %v624 = vand.u32 %v623, 127
        %v625 = vstv %s622
        %v626 = vadd.s32 %v625, %v624
        %p627 = scmp.lt.s32.totalorder %s21, %s20
        %vm628 = vcmp.le.s32.totalorder %v626, %v621
        %s629 = scalar_select %p627, 1, 0
        %v630 = vstv %s629
        %vm631 = vcmp.eq.s32.totalorder %v630, 1
        %vm632 = vmor %vm631, %vm628
        %v633 = vsel %vm632, %v613, -1e+30
        %v634 = vsel %vm632, %v614, -1e+30
        %v635 = vsel %vm632, %v615, -1e+30
        %v636 = vsel %vm632, %v616, -1e+30
        %v637 = vld [vmem:[#allocation2] sm:$0xff]
        %v638 = vld [vmem:[#allocation2 + $0x8] sm:$0xff]
        %v639 = vld [vmem:[#allocation2 + $0x10] sm:$0xff]
        %v640 = vld [vmem:[#allocation2 + $0x18] sm:$0xff]
        %v641 = vsel %vm308, %v633, -inf
        %642 = vmax.xlane.f32.xlu0 %v641
        %v643 = vpop.xlane.xlu0 %642
        %v644 = vsel %vm308, %v634, -inf
        %645 = vmax.xlane.f32.xlu0 %v644
        %v646 = vpop.xlane.xlu0 %645
        %v647 = vsel %vm308, %v635, -inf
        %648 = vmax.xlane.f32.xlu0 %v647
        %v649 = vpop.xlane.xlu0 %648
        %v650 = vsel %vm308, %v636, -inf
        %651 = vmax.xlane.f32.xlu0 %v650
        %v652 = vpop.xlane.xlu0 %651
        %v653 = vmax.f32 %v637, %v643
        %v654 = vmax.f32 %v638, %v646
        %v655 = vmax.f32 %v639, %v649
        %v656 = vmax.f32 %v640, %v652
        %v657 = vsub.f32 %v637, %v653
        %v658 = vsub.f32 %v638, %v654
        %v659 = vsub.f32 %v639, %v655
        %v660 = vsub.f32 %v640, %v656
        %v661 = vmul.f32 %v657, 1.442695
        %v662 = vpow.pop %v661
        %v663 = vmul.f32 %v658, 1.442695
        %v664 = vpow.pop %v663
        %v665 = vmul.f32 %v659, 1.442695
        %v666 = vpow.pop %v665
        %v667 = vmul.f32 %v660, 1.442695
        %v668 = vpow.pop %v667
        %670 = vset.pattern.permute.xlu0 0
        %671 = vperm.xlu0 %670, %v653
        %v672 = vpop.permute.xlu0 %671
        %675 = vset.pattern.permute.xlu0 0
        %676 = vperm.xlu0 %675, %v654
        %v677 = vpop.permute.xlu0 %676
        %680 = vset.pattern.permute.xlu0 0
        %681 = vperm.xlu0 %680, %v655
        %v682 = vpop.permute.xlu0 %681
        %685 = vset.pattern.permute.xlu0 0
        %686 = vperm.xlu0 %685, %v656
        %v687 = vpop.permute.xlu0 %686
        %v689 = vsub.f32 %v633, %v672
        %v690 = vsub.f32 %v634, %v677
        %v691 = vsub.f32 %v635, %v682
        %v692 = vsub.f32 %v636, %v687
        %v693 = vmul.f32 %v689, 1.442695
        %v694 = vpow.pop %v693
        %v695 = vmul.f32 %v690, 1.442695
        %v696 = vpow.pop %v695
        %v697 = vmul.f32 %v691, 1.442695
        %v698 = vpow.pop %v697
        %v699 = vmul.f32 %v692, 1.442695
        %v700 = vpow.pop %v699
        %v701 = vld [vmem:[#allocation3] sm:$0xff]
        %v702 = vld [vmem:[#allocation3 + $0x8] sm:$0xff]
        %v703 = vld [vmem:[#allocation3 + $0x10] sm:$0xff]
        %v704 = vld [vmem:[#allocation3 + $0x18] sm:$0xff]
        %v705 = vmul.f32 %v662, %v701
        %v706 = vmul.f32 %v664, %v702
        %v707 = vmul.f32 %v666, %v703
        %v708 = vmul.f32 %v668, %v704
        %v709 = vsel %vm308, %v694, 0.0
        %710 = vadd.xlane.f32.xlu0 %v709
        %v711 = vpop.xlane.xlu0 %710
        %v712 = vsel %vm308, %v696, 0.0
        %713 = vadd.xlane.f32.xlu0 %v712
        %v714 = vpop.xlane.xlu0 %713
        %v715 = vsel %vm308, %v698, 0.0
        %716 = vadd.xlane.f32.xlu0 %v715
        %v717 = vpop.xlane.xlu0 %716
        %v718 = vsel %vm308, %v700, 0.0
        %719 = vadd.xlane.f32.xlu0 %v718
        %v720 = vpop.xlane.xlu0 %719
        %v721 = vadd.f32 %v705, %v711
        %v722 = vadd.f32 %v706, %v714
        %v723 = vadd.f32 %v707, %v717
        %v724 = vadd.f32 %v708, %v720
        %vm725 = vcmask 7168
        %726 = vst.msk [vmem:[#allocation3] sm:$0xff] %vm725, %v721
        %727 = vst.msk [vmem:[#allocation3 + $0x8] sm:$0xff] %vm725, %v722
        %728 = vst.msk [vmem:[#allocation3 + $0x10] sm:$0xff] %vm725, %v723
        %729 = vst.msk [vmem:[#allocation3 + $0x18] sm:$0xff] %vm725, %v724
        %v730 = vld [vmem:[#allocation4] sm:$0xff]
        %v731 = vld [vmem:[#allocation4 + $0x8] sm:$0xff]
        %v732 = vld [vmem:[#allocation4 + $0x10] sm:$0xff]
        %v733 = vld [vmem:[#allocation4 + $0x18] sm:$0xff]
        %735 = vset.pattern.permute.xlu0 0
        %736 = vperm.xlu0 %735, %v662
        %v737 = vpop.permute.xlu0 %736
        %740 = vset.pattern.permute.xlu0 0
        %741 = vperm.xlu0 %740, %v664
        %v742 = vpop.permute.xlu0 %741
        %745 = vset.pattern.permute.xlu0 0
        %746 = vperm.xlu0 %745, %v666
        %v747 = vpop.permute.xlu0 %746
        %750 = vset.pattern.permute.xlu0 0
        %751 = vperm.xlu0 %750, %v668
        %v752 = vpop.permute.xlu0 %751
        %v754 = vmul.f32 %v737, %v730
        %v755 = vmul.f32 %v742, %v731
        %v756 = vmul.f32 %v747, %v732
        %v757 = vmul.f32 %v752, %v733
        %v758 = vld [vmem:[%s267] sm:$0xff]
        %v759 = vld [vmem:[%s267 + $0x8] sm:$0xff]
        %v760 = vld [vmem:[%s267 + $0x10] sm:$0xff]
        %v761 = vld [vmem:[%s267 + $0x18] sm:$0xff]
        %v763 = vsel %vm308, %v694, 0
        %765 = vmatprep.subr.mxu0 0.0
        %766 = vmatpush1.msra.mxu0 %v758
        %767 = vmatprep.subr.mxu0 0.0
        %768 = vmatpush1.msra.mxu0 0.0
        %769 = vmatprep.subr.mxu0 0.0
        %770 = vmatpush1.msra.mxu0 0.0
        %771 = vmatprep.subr.mxu0 0.0
        %772 = vmatpush1.msra.mxu0 0.0
        %773 = vmatprep.subr.mxu0 0.0
        %774 = vmatpush1.msra.mxu0 0.0
        %775 = vmatprep.subr.mxu0 0.0
        %776 = vmatpush1.msra.mxu0 0.0
        %777 = vmatprep.subr.mxu0 0.0
        %778 = vmatpush1.msra.mxu0 0.0
        %779 = vmatprep.subr.mxu0 0.0
        %780 = vmatpush1.msra.mxu0 0.0
        %781 = vmatprep.subr.mxu0 0.0
        %782 = vmatpush1.msra.mxu0 0.0
        %783 = vmatprep.subr.mxu0 0.0
        %784 = vmatpush1.msra.mxu0 0.0
        %785 = vmatprep.subr.mxu0 0.0
        %786 = vmatpush1.msra.mxu0 0.0
        %787 = vmatprep.subr.mxu0 0.0
        %788 = vmatpush1.msra.mxu0 0.0
        %789 = vmatprep.subr.mxu0 0.0
        %790 = vmatpush1.msra.mxu0 0.0
        %791 = vmatprep.subr.mxu0 0.0
        %792 = vmatpush1.msra.mxu0 0.0
        %793 = vmatprep.subr.mxu0 0.0
        %794 = vmatpush1.msra.mxu0 0.0
        %795 = vmatprep.subr.mxu0 0.0
        %796 = vmatpush1.msra.mxu0 0.0
        %797 = vmatprep.subr.mxu0 0.0
        %798 = vmatpush1.msra.mxu0 0.0
        %799 = vmatprep.subr.mxu0 0.0
        %800 = vmatpush1.msra.mxu0 0.0
        %801 = vmatprep.subr.mxu0 0.0
        %802 = vmatpush1.msra.mxu0 0.0
        %803 = vmatprep.subr.mxu0 0.0
        %804 = vmatpush1.msra.mxu0 0.0
        %805 = vmatprep.subr.mxu0 0.0
        %806 = vmatpush1.msra.mxu0 0.0
        %807 = vmatprep.subr.mxu0 0.0
        %808 = vmatpush1.msra.mxu0 0.0
        %809 = vmatprep.subr.mxu0 0.0
        %810 = vmatpush1.msra.mxu0 0.0
        %811 = vmatprep.subr.mxu0 0.0
        %812 = vmatpush1.msra.mxu0 0.0
        %813 = vmatprep.subr.mxu0 0.0
        %814 = vmatpush1.msra.mxu0 0.0
        %815 = vmatprep.subr.mxu0 0.0
        %816 = vmatpush1.msra.mxu0 0.0
        %817 = vmatprep.subr.mxu0 0.0
        %818 = vmatpush1.msra.mxu0 0.0
        %819 = vmatprep.subr.mxu0 0.0
        %820 = vmatpush1.msra.mxu0 0.0
        %821 = vmatprep.subr.mxu0 0.0
        %822 = vmatpush1.msra.mxu0 0.0
        %823 = vmatprep.subr.mxu0 0.0
        %824 = vmatpush1.msra.mxu0 0.0
        %825 = vmatprep.subr.mxu0 0.0
        %826 = vmatpush1.msra.mxu0 0.0
        %827 = vmatprep.subr.mxu0 0.0
        %828 = vmatpush1.msra.mxu0 0.0
        %829 = vmatprep.mubr.f32.mxu0 0.0
        %830 = vmatmul.mubr.f32.gmra.mrb[0].mxu0 %v763
        %v831 = vpop.f32.mrb[0].mxu0
        %v832 = vadd.f32 0.0, %v831
        %v833 = vpop.f32.mrb[0].mxu0
        %834 = vdwg.mxu0
        %v836 = vsel %vm308, %v696, 0
        %838 = vmatprep.subr.mxu0 0.0
        %839 = vmatpush1.msra.mxu0 %v759
        %840 = vmatprep.subr.mxu0 0.0
        %841 = vmatpush1.msra.mxu0 0.0
        %842 = vmatprep.subr.mxu0 0.0
        %843 = vmatpush1.msra.mxu0 0.0
        %844 = vmatprep.subr.mxu0 0.0
        %845 = vmatpush1.msra.mxu0 0.0
        %846 = vmatprep.subr.mxu0 0.0
        %847 = vmatpush1.msra.mxu0 0.0
        %848 = vmatprep.subr.mxu0 0.0
        %849 = vmatpush1.msra.mxu0 0.0
        %850 = vmatprep.subr.mxu0 0.0
        %851 = vmatpush1.msra.mxu0 0.0
        %852 = vmatprep.subr.mxu0 0.0
        %853 = vmatpush1.msra.mxu0 0.0
        %854 = vmatprep.subr.mxu0 0.0
        %855 = vmatpush1.msra.mxu0 0.0
        %856 = vmatprep.subr.mxu0 0.0
        %857 = vmatpush1.msra.mxu0 0.0
        %858 = vmatprep.subr.mxu0 0.0
        %859 = vmatpush1.msra.mxu0 0.0
        %860 = vmatprep.subr.mxu0 0.0
        %861 = vmatpush1.msra.mxu0 0.0
        %862 = vmatprep.subr.mxu0 0.0
        %863 = vmatpush1.msra.mxu0 0.0
        %864 = vmatprep.subr.mxu0 0.0
        %865 = vmatpush1.msra.mxu0 0.0
        %866 = vmatprep.subr.mxu0 0.0
        %867 = vmatpush1.msra.mxu0 0.0
        %868 = vmatprep.subr.mxu0 0.0
        %869 = vmatpush1.msra.mxu0 0.0
        %870 = vmatprep.subr.mxu0 0.0
        %871 = vmatpush1.msra.mxu0 0.0
        %872 = vmatprep.subr.mxu0 0.0
        %873 = vmatpush1.msra.mxu0 0.0
        %874 = vmatprep.subr.mxu0 0.0
        %875 = vmatpush1.msra.mxu0 0.0
        %876 = vmatprep.subr.mxu0 0.0
        %877 = vmatpush1.msra.mxu0 0.0
        %878 = vmatprep.subr.mxu0 0.0
        %879 = vmatpush1.msra.mxu0 0.0
        %880 = vmatprep.subr.mxu0 0.0
        %881 = vmatpush1.msra.mxu0 0.0
        %882 = vmatprep.subr.mxu0 0.0
        %883 = vmatpush1.msra.mxu0 0.0
        %884 = vmatprep.subr.mxu0 0.0
        %885 = vmatpush1.msra.mxu0 0.0
        %886 = vmatprep.subr.mxu0 0.0
        %887 = vmatpush1.msra.mxu0 0.0
        %888 = vmatprep.subr.mxu0 0.0
        %889 = vmatpush1.msra.mxu0 0.0
        %890 = vmatprep.subr.mxu0 0.0
        %891 = vmatpush1.msra.mxu0 0.0
        %892 = vmatprep.subr.mxu0 0.0
        %893 = vmatpush1.msra.mxu0 0.0
        %894 = vmatprep.subr.mxu0 0.0
        %895 = vmatpush1.msra.mxu0 0.0
        %896 = vmatprep.subr.mxu0 0.0
        %897 = vmatpush1.msra.mxu0 0.0
        %898 = vmatprep.subr.mxu0 0.0
        %899 = vmatpush1.msra.mxu0 0.0
        %900 = vmatprep.subr.mxu0 0.0
        %901 = vmatpush1.msra.mxu0 0.0
        %902 = vmatprep.mubr.f32.mxu0 0.0
        %903 = vmatmul.mubr.f32.gmra.mrb[0].mxu0 %v836
        %v904 = vpop.f32.mrb[0].mxu0
        %v905 = vadd.f32 0.0, %v904
        %v906 = vpop.f32.mrb[0].mxu0
        %907 = vdwg.mxu0
        %v909 = vsel %vm308, %v698, 0
        %911 = vmatprep.subr.mxu0 0.0
        %912 = vmatpush1.msra.mxu0 %v760
        %913 = vmatprep.subr.mxu0 0.0
        %914 = vmatpush1.msra.mxu0 0.0
        %915 = vmatprep.subr.mxu0 0.0
        %916 = vmatpush1.msra.mxu0 0.0
        %917 = vmatprep.subr.mxu0 0.0
        %918 = vmatpush1.msra.mxu0 0.0
        %919 = vmatprep.subr.mxu0 0.0
        %920 = vmatpush1.msra.mxu0 0.0
        %921 = vmatprep.subr.mxu0 0.0
        %922 = vmatpush1.msra.mxu0 0.0
        %923 = vmatprep.subr.mxu0 0.0
        %924 = vmatpush1.msra.mxu0 0.0
        %925 = vmatprep.subr.mxu0 0.0
        %926 = vmatpush1.msra.mxu0 0.0
        %927 = vmatprep.subr.mxu0 0.0
        %928 = vmatpush1.msra.mxu0 0.0
        %929 = vmatprep.subr.mxu0 0.0
        %930 = vmatpush1.msra.mxu0 0.0
        %931 = vmatprep.subr.mxu0 0.0
        %932 = vmatpush1.msra.mxu0 0.0
        %933 = vmatprep.subr.mxu0 0.0
        %934 = vmatpush1.msra.mxu0 0.0
        %935 = vmatprep.subr.mxu0 0.0
        %936 = vmatpush1.msra.mxu0 0.0
        %937 = vmatprep.subr.mxu0 0.0
        %938 = vmatpush1.msra.mxu0 0.0
        %939 = vmatprep.subr.mxu0 0.0
        %940 = vmatpush1.msra.mxu0 0.0
        %941 = vmatprep.subr.mxu0 0.0
        %942 = vmatpush1.msra.mxu0 0.0
        %943 = vmatprep.subr.mxu0 0.0
        %944 = vmatpush1.msra.mxu0 0.0
        %945 = vmatprep.subr.mxu0 0.0
        %946 = vmatpush1.msra.mxu0 0.0
        %947 = vmatprep.subr.mxu0 0.0
        %948 = vmatpush1.msra.mxu0 0.0
        %949 = vmatprep.subr.mxu0 0.0
        %950 = vmatpush1.msra.mxu0 0.0
        %951 = vmatprep.subr.mxu0 0.0
        %952 = vmatpush1.msra.mxu0 0.0
        %953 = vmatprep.subr.mxu0 0.0
        %954 = vmatpush1.msra.mxu0 0.0
        %955 = vmatprep.subr.mxu0 0.0
        %956 = vmatpush1.msra.mxu0 0.0
        %957 = vmatprep.subr.mxu0 0.0
        %958 = vmatpush1.msra.mxu0 0.0
        %959 = vmatprep.subr.mxu0 0.0
        %960 = vmatpush1.msra.mxu0 0.0
        %961 = vmatprep.subr.mxu0 0.0
        %962 = vmatpush1.msra.mxu0 0.0
        %963 = vmatprep.subr.mxu0 0.0
        %964 = vmatpush1.msra.mxu0 0.0
        %965 = vmatprep.subr.mxu0 0.0
        %966 = vmatpush1.msra.mxu0 0.0
        %967 = vmatprep.subr.mxu0 0.0
        %968 = vmatpush1.msra.mxu0 0.0
        %969 = vmatprep.subr.mxu0 0.0
        %970 = vmatpush1.msra.mxu0 0.0
        %971 = vmatprep.subr.mxu0 0.0
        %972 = vmatpush1.msra.mxu0 0.0
        %973 = vmatprep.subr.mxu0 0.0
        %974 = vmatpush1.msra.mxu0 0.0
        %975 = vmatprep.mubr.f32.mxu0 0.0
        %976 = vmatmul.mubr.f32.gmra.mrb[0].mxu0 %v909
        %v977 = vpop.f32.mrb[0].mxu0
        %v978 = vadd.f32 0.0, %v977
        %v979 = vpop.f32.mrb[0].mxu0
        %980 = vdwg.mxu0
        %v982 = vsel %vm308, %v700, 0
        %984 = vmatprep.subr.mxu0 0.0
        %985 = vmatpush1.msra.mxu0 %v761
        %986 = vmatprep.subr.mxu0 0.0
        %987 = vmatpush1.msra.mxu0 0.0
        %988 = vmatprep.subr.mxu0 0.0
        %989 = vmatpush1.msra.mxu0 0.0
        %990 = vmatprep.subr.mxu0 0.0
        %991 = vmatpush1.msra.mxu0 0.0
        %992 = vmatprep.subr.mxu0 0.0
        %993 = vmatpush1.msra.mxu0 0.0
        %994 = vmatprep.subr.mxu0 0.0
        %995 = vmatpush1.msra.mxu0 0.0
        %996 = vmatprep.subr.mxu0 0.0
        %997 = vmatpush1.msra.mxu0 0.0
        %998 = vmatprep.subr.mxu0 0.0
        %999 = vmatpush1.msra.mxu0 0.0
        %1000 = vmatprep.subr.mxu0 0.0
        %1001 = vmatpush1.msra.mxu0 0.0
        %1002 = vmatprep.subr.mxu0 0.0
        %1003 = vmatpush1.msra.mxu0 0.0
        %1004 = vmatprep.subr.mxu0 0.0
        %1005 = vmatpush1.msra.mxu0 0.0
        %1006 = vmatprep.subr.mxu0 0.0
        %1007 = vmatpush1.msra.mxu0 0.0
        %1008 = vmatprep.subr.mxu0 0.0
        %1009 = vmatpush1.msra.mxu0 0.0
        %1010 = vmatprep.subr.mxu0 0.0
        %1011 = vmatpush1.msra.mxu0 0.0
        %1012 = vmatprep.subr.mxu0 0.0
        %1013 = vmatpush1.msra.mxu0 0.0
        %1014 = vmatprep.subr.mxu0 0.0
        %1015 = vmatpush1.msra.mxu0 0.0
        %1016 = vmatprep.subr.mxu0 0.0
        %1017 = vmatpush1.msra.mxu0 0.0
        %1018 = vmatprep.subr.mxu0 0.0
        %1019 = vmatpush1.msra.mxu0 0.0
        %1020 = vmatprep.subr.mxu0 0.0
        %1021 = vmatpush1.msra.mxu0 0.0
        %1022 = vmatprep.subr.mxu0 0.0
        %1023 = vmatpush1.msra.mxu0 0.0
        %1024 = vmatprep.subr.mxu0 0.0
        %1025 = vmatpush1.msra.mxu0 0.0
        %1026 = vmatprep.subr.mxu0 0.0
        %1027 = vmatpush1.msra.mxu0 0.0
        %1028 = vmatprep.subr.mxu0 0.0
        %1029 = vmatpush1.msra.mxu0 0.0
        %1030 = vmatprep.subr.mxu0 0.0
        %1031 = vmatpush1.msra.mxu0 0.0
        %1032 = vmatprep.subr.mxu0 0.0
        %1033 = vmatpush1.msra.mxu0 0.0
        %1034 = vmatprep.subr.mxu0 0.0
        %1035 = vmatpush1.msra.mxu0 0.0
        %1036 = vmatprep.subr.mxu0 0.0
        %1037 = vmatpush1.msra.mxu0 0.0
        %1038 = vmatprep.subr.mxu0 0.0
        %1039 = vmatpush1.msra.mxu0 0.0
        %1040 = vmatprep.subr.mxu0 0.0
        %1041 = vmatpush1.msra.mxu0 0.0
        %1042 = vmatprep.subr.mxu0 0.0
        %1043 = vmatpush1.msra.mxu0 0.0
        %1044 = vmatprep.subr.mxu0 0.0
        %1045 = vmatpush1.msra.mxu0 0.0
        %1046 = vmatprep.subr.mxu0 0.0
        %1047 = vmatpush1.msra.mxu0 0.0
        %1048 = vmatprep.mubr.f32.mxu0 0.0
        %1049 = vmatmul.mubr.f32.gmra.mrb[0].mxu0 %v982
        %v1050 = vpop.f32.mrb[0].mxu0
        %v1051 = vadd.f32 0.0, %v1050
        %v1052 = vpop.f32.mrb[0].mxu0
        %1053 = vdwg.mxu0
        %v1054 = vadd.f32 %v754, %v832
        %v1055 = vadd.f32 %v755, %v905
        %v1056 = vadd.f32 %v756, %v978
        %v1057 = vadd.f32 %v757, %v1051
        %1058 = vst.msk [vmem:[#allocation4] sm:$0xff] %vm308, %v1054
        %1059 = vst.msk [vmem:[#allocation4 + $0x8] sm:$0xff] %vm308, %v1055
        %1060 = vst.msk [vmem:[#allocation4 + $0x10] sm:$0xff] %vm308, %v1056
        %1061 = vst.msk [vmem:[#allocation4 + $0x18] sm:$0xff] %vm308, %v1057
        %1062 = vst.msk [vmem:[#allocation2] sm:$0xff] %vm725, %v653
        %1063 = vst.msk [vmem:[#allocation2 + $0x8] sm:$0xff] %vm725, %v654
        %1064 = vst.msk [vmem:[#allocation2 + $0x10] sm:$0xff] %vm725, %v655
        %1065 = vst.msk [vmem:[#allocation2 + $0x18] sm:$0xff] %vm725, %v656
      $region40: #{gptj_attention_forward.4} parent=31 // pred_fallthru
        _
      // Predicated region
      $region41: #{gptj_attention_forward.4} parent=31 // pred_check
        %p1066 = pneg %p278
      $region42: #{gptj_attention_forward.4} parent=31 // pred_check_branch
        %1068 = sbr.rel (%p1066) target = $region44
      $region43: #{gptj_attention_forward.4} parent=31 // pred_region
        %v1069 = vld [vmem:[#allocation3] sm:$0xff]
        %v1070 = vld [vmem:[#allocation3 + $0x8] sm:$0xff]
        %v1071 = vld [vmem:[#allocation3 + $0x10] sm:$0xff]
        %v1072 = vld [vmem:[#allocation3 + $0x18] sm:$0xff]
        %v1073 = vrcp.pop %v1069
        %v1074 = vrcp.pop %v1070
        %v1075 = vrcp.pop %v1071
        %v1076 = vrcp.pop %v1072
        %v1077 = vld [vmem:[#allocation4] sm:$0xff]
        %v1078 = vld [vmem:[#allocation4 + $0x8] sm:$0xff]
        %v1079 = vld [vmem:[#allocation4 + $0x10] sm:$0xff]
        %v1080 = vld [vmem:[#allocation4 + $0x18] sm:$0xff]
        %1082 = vset.pattern.permute.xlu0 0
        %1083 = vperm.xlu0 %1082, %v1073
        %v1084 = vpop.permute.xlu0 %1083
        %1087 = vset.pattern.permute.xlu0 0
        %1088 = vperm.xlu0 %1087, %v1074
        %v1089 = vpop.permute.xlu0 %1088
        %1092 = vset.pattern.permute.xlu0 0
        %1093 = vperm.xlu0 %1092, %v1075
        %v1094 = vpop.permute.xlu0 %1093
        %1097 = vset.pattern.permute.xlu0 0
        %1098 = vperm.xlu0 %1097, %v1076
        %v1099 = vpop.permute.xlu0 %1098
        %v1101 = vmul.f32 %v1077, %v1084
        %v1102 = vmul.f32 %v1078, %v1089
        %v1103 = vmul.f32 %v1079, %v1094
        %v1104 = vmul.f32 %v1080, %v1099
        %vm1105 = vcmask 64512
        %1106 = vst.msk [vmem:[%s276] sm:$0xff] %vm1105, %v1101
        %1107 = vst.msk [vmem:[%s276 + $0x8] sm:$0xff] %vm1105, %v1102
        %1108 = vst.msk [vmem:[%s276 + $0x10] sm:$0xff] %vm1105, %v1103
        %1109 = vst.msk [vmem:[%s276 + $0x18] sm:$0xff] %vm1105, %v1104
      $region44: #{gptj_attention_forward.4} parent=31 // pred_fallthru
        _
      %s1110 = smul.u32 4, %s19
      %p1111 = scmp.lt.s32.totalorder %s1110, 7
      %s1112 = scalar_select %p1111, %s1110, 7
      %p1113 = scmp.lt.s32.totalorder %s20, 0
      %s1114 = scalar_select %p1113, %s20, 0
      %s1115 = sadd.s32 %s1114, %s1112
      %s1116 = smul.addr %s1115, 8
      %s1117 = scalar_lea.vmem %s3, %s1116
      // Predicated region
      $region45: #{gptj_attention_forward.4} parent=31 // pred_check
        %p1118 = pneg %p137
      $region46: #{gptj_attention_forward.4} parent=31 // pred_check_branch
        %1120 = sbr.rel (%p1118) target = $region48
      $region47: #{gptj_attention_forward.4} parent=31 // pred_region
        %s1121 = smul.u32 4, %s19
      $region48: #{gptj_attention_forward.4} parent=31 // pred_fallthru
        _
    $region32: #{gptj_attention_forward.4} parent=5 // pred_fallthru
      _
    %p1122 = scmp.le.s32.totalorder 2, %s9
    // Predicated region
    $region49: #{gptj_attention_forward.4} parent=5 // pred_check
      %p1123 = pneg %p1122
    $region50: #{gptj_attention_forward.4} parent=5 // pred_check_branch
      %1125 = sbr.rel (%p1123) target = $region52
    $region51: #{gptj_attention_forward.4} parent=5 // pred_region
      %s1126 = ssub.s32 %s9, 2
      // Predicated region
      $region53: #{gptj_attention_forward.4} parent=51 // pred_check
        %p1127 = pneg %p143
      $region54: #{gptj_attention_forward.4} parent=51 // pred_check_branch
        %1129 = sbr.rel (%p1127) target = $region56
      $region55: #{gptj_attention_forward.4} parent=51 // pred_region
        %s1130 = smul.u32 4, %s22
        %p1131 = scmp.lt.s32.totalorder %s1130, 7
        %s1132 = scalar_select %p1131, %s1130, 7
        %p1133 = scmp.lt.s32.totalorder %s23, 0
        %s1134 = scalar_select %p1133, %s23, 0
        %s1135 = sadd.s32 %s1134, %s1132
        %s1136 = smul.addr %s1135, 8
        %s1137 = scalar_lea.vmem %s3, %s1136
      $region56: #{gptj_attention_forward.4} parent=51 // pred_fallthru
        _
    $region52: #{gptj_attention_forward.4} parent=5 // pred_fallthru
      _
  $region6: #{gptj_attention_forward.4} parent=0 // loop_footer
    %s13 = sadd.s32 1, %s9
  $region7: #{gptj_attention_forward.4} parent=0 // loop_footer_branch
    %8 = sbr.rel target = $region3
  $region8: #{gptj_attention_forward.4} parent=0 // loop_exit
    _

</llo_original>
